<compile_context>
chip_gen: v6e
topology: v6e:2x2x1
jax: 0.10.0
libtpu: 0.0.40
codegen_flags: <defaults>
</compile_context>

<pallas_src>
import functools

import jax
import jax.numpy as jnp
from jax.experimental import pallas as pl
from jax.experimental.pallas import tpu as pltpu

_LANE = 128
_SUBLANE = 8


def _round_up(x, m):
    return ((x + m - 1) // m) * m


def _hcnn_kernel(past_horizon, forecast_horizon, n_features_Y, head_width,
                 bf16_activation,
                 y_ref, init_ref, a_ref, out_ref, state_ref):
    """One grid program = full time recurrence for one batch tile.

    y_ref     : (past, Bt, head_width)   observations in their input dtype,
                                         features zero-padded to head_width lanes
    init_ref  : (1, S_pad)               learned initial state (zero-padded, f32)
    a_ref     : (S_pad, S_pad)           A.weight^T (zero-padded; f32 or bf16)
    out_ref   : (T, Bt, head_width)      output slab; only first n_features_Y lanes matter
    state_ref : (Bt, S_pad)              f32 VMEM scratch holding the hidden state
    """
    F = n_features_Y
    b_tile, s_pad = state_ref.shape
    mm_dtype = a_ref.dtype
    # bf16 tanh only makes sense together with a bf16 MXU path (v6e/v7x).
    act_dtype = jnp.bfloat16 if (bf16_activation and mm_dtype == jnp.bfloat16) \
        else jnp.float32

    # Broadcast the learned initial state over the batch tile.
    state_ref[...] = jnp.broadcast_to(init_ref[...].astype(jnp.float32),
                                      state_ref.shape)

    # Lane mask selecting the observed neurons (first F lanes of the head block).
    lane_idx = jax.lax.broadcasted_iota(jnp.int32, (b_tile, head_width), 1)
    obs_mask = lane_idx < F

    def advance(forced_state):
        # Single state write per step (after the matmul); no intermediate
        # store/reload of the teacher-forced state.
        act = jnp.tanh(forced_state.astype(act_dtype))
        state_ref[...] = jnp.dot(act.astype(mm_dtype), a_ref[...],
                                 preferred_element_type=jnp.float32)

    def past_body(t, carry):
        state = state_ref[...]                          # one full (Bt, S_pad) load
        head = state[:, 0:head_width]                   # aligned 128-lane slice
        y_blk = y_ref[t].astype(jnp.float32)            # (Bt, head_width), zeros beyond F
        # First F lanes are (expectation - Y_t); remaining lanes are junk that is
        # sliced off in the wrapper. Lane-dense, unmasked store.
        out_ref[t] = (head - y_blk).astype(out_ref.dtype)
        # Teacher forcing (probability 1.0): observed neurons <- Y_t. Build the
        # forced state as a value; both pieces are 128-lane aligned.
        forced_head = jnp.where(obs_mask, y_blk, head)
        if head_width == s_pad:
            forced = forced_head
        else:
            forced = jnp.concatenate([forced_head, state[:, head_width:]], axis=1)
        advance(forced)
        return carry

    def forecast_body(t, carry):
        state = state_ref[...]
        out_ref[past_horizon + t] = state[:, 0:head_width].astype(out_ref.dtype)
        advance(state)
        return carry

    # Bounded partial unroll: keeps ILP / overlap visibility for the scheduler
    # without blowing vregs or compile time for long horizons.
    jax.lax.fori_loop(0, past_horizon, past_body, 0,
                      unroll=min(8, past_horizon))
    if forecast_horizon > 0:
        jax.lax.fori_loop(0, forecast_horizon, forecast_body, 0,
                          unroll=min(8, forecast_horizon))


def hcnn_forward(Y, init_state, A_weight, *, forecast_horizon,
                 b_tile=None, use_bf16_matmul=False, bf16_activation=None):
    """Y: (past_horizon, batch, n_features_Y). Returns (past+forecast, batch, n_features_Y).

    use_bf16_matmul: run the A matmul in bf16 (MXU-native on v5e/v6e/v7x);
                     accumulations stay f32. Introduces small drift through the
                     free-running forecast steps vs. the f32 reference.
    bf16_activation: compute tanh in bf16 as well (defaults to use_bf16_matmul;
                     prefer False on v5e, which has no bf16 VPU/EUP).
    """
    past_horizon, batch, n_features_Y = Y.shape
    n_state = init_state.shape[1]
    if n_features_Y > n_state:
        raise ValueError("n_state_neurons must be >= n_features_Y")
    T = past_horizon + forecast_horizon
    out_dtype = Y.dtype
    if bf16_activation is None:
        bf16_activation = use_bf16_matmul

    # Hardware-granule padding. Padded A rows/cols and padded init entries are
    # zero, so padded state neurons remain exactly zero through tanh(0)=0.
    S_pad = _round_up(max(n_state, 1), _LANE)
    F_pad = _round_up(max(n_features_Y, 1), _LANE)       # "head" width (>= F)
    assert F_pad <= S_pad, "padded feature head exceeds padded state width"

    # Batch tiling: fill the MXU rows (<=256) and split large batches into
    # near-equal tiles (>=2 tiles => shardable across v7x TensorCores).
    B_min = _round_up(max(batch, 1), _SUBLANE)
    if b_tile is None:
        if B_min <= 256:
            b_tile = B_min
        else:
            n_tiles = -(-B_min // 256)                    # ceil
            b_tile = _round_up(-(-B_min // n_tiles), _SUBLANE)
    b_tile = _round_up(b_tile, _SUBLANE)
    B_pad = _round_up(B_min, b_tile)
    n_batch_tiles = B_pad // b_tile

    # Keep Y in its input dtype (no f32 up-cast); cast per step inside the kernel.
    Y_pad = jnp.pad(Y, ((0, 0), (0, B_pad - batch), (0, F_pad - n_features_Y)))
    init_pad = jnp.pad(init_state.astype(jnp.float32),
                       ((0, 0), (0, S_pad - n_state)))
    mm_dtype = jnp.bfloat16 if use_bf16_matmul else jnp.float32
    A_t = jnp.pad(A_weight.astype(jnp.float32).T,
                  ((0, S_pad - n_state), (0, S_pad - n_state))).astype(mm_dtype)

    # Explicit VMEM budget from the actual resident footprint (double-buffered
    # blocks + persistent scratch), never below the 32 MiB default.
    itemsize = lambda dt: jnp.dtype(dt).itemsize
    y_bytes = past_horizon * b_tile * F_pad * itemsize(Y_pad.dtype)
    out_bytes = T * b_tile * F_pad * itemsize(out_dtype)
    a_bytes = S_pad * S_pad * itemsize(mm_dtype)
    init_bytes = S_pad * 4
    state_bytes = b_tile * S_pad * 4
    footprint = 2 * (y_bytes + out_bytes + a_bytes + init_bytes) + state_bytes
    vmem_limit = min(max(int(footprint * 1.25) + (2 << 20), 32 << 20), 100 << 20)

    kernel = functools.partial(_hcnn_kernel, past_horizon, forecast_horizon,
                               n_features_Y, F_pad, bf16_activation)

    out = pl.pallas_call(
        kernel,
        out_shape=jax.ShapeDtypeStruct((T, B_pad, F_pad), out_dtype),
        grid_spec=pltpu.PrefetchScalarGridSpec(
            num_scalar_prefetch=0,
            grid=(n_batch_tiles,),                        # batch tiles are independent
            in_specs=[
                pl.BlockSpec((past_horizon, b_tile, F_pad), lambda b: (0, b, 0)),
                pl.BlockSpec((1, S_pad), lambda b: (0, 0)),
                pl.BlockSpec((S_pad, S_pad), lambda b: (0, 0)),
            ],
            out_specs=pl.BlockSpec((T, b_tile, F_pad), lambda b: (0, b, 0)),
            scratch_shapes=[pltpu.VMEM((b_tile, S_pad), jnp.float32)],
        ),
        compiler_params=pltpu.CompilerParams(
            dimension_semantics=("parallel",),            # batch axis: megacore-shardable
            vmem_limit_bytes=vmem_limit),
    )(Y_pad, init_pad, A_t)

    return out[:, :batch, :n_features_Y].astype(out_dtype)


def hcnn_forward_ref(Y, init_state, A_weight, *, forecast_horizon):
    """Pure-JAX reference mirroring the PyTorch forward exactly."""
    past_horizon, batch, F = Y.shape
    S = init_state.shape[1]
    eye = jnp.eye(F, S, dtype=Y.dtype)
    state = jnp.broadcast_to(init_state, (batch, S))
    outs = []
    for t in range(past_horizon):
        expectation = state @ eye.T
        err = expectation - Y[t]
        outs.append(err)
        state = jnp.tanh(state - err @ eye) @ A_weight.T
    for _ in range(forecast_horizon):
        expectation = state @ eye.T
        outs.append(expectation)
        state = jnp.tanh(state) @ A_weight.T
    return jnp.stack(outs, axis=0)


if __name__ == "__main__":
    # Small deterministic config (matches HCNN.__init__ parameter shapes).
    n_state_neurons = 32
    n_features_Y = 4
    past_horizon = 8
    forecast_horizon = 4
    batch = 2

    key = jax.random.PRNGKey(0)
    k_y, k_init, k_a = jax.random.split(key, 3)

    # Observations: (past_horizon, batch, n_features_Y)
    Y = jax.random.normal(k_y, (past_horizon, batch, n_features_Y), jnp.float32)

    # Parameters (deterministic synthetic init):
    #   init_state ~ randn(1, n_state_neurons)     (as in HCNN.__init__)
    #   A.weight   ~ U(-1/sqrt(S), 1/sqrt(S))      (nn.Linear default init, bias=False)
    init_state = jax.random.normal(k_init, (1, n_state_neurons), jnp.float32)
    bound = 1.0 / jnp.sqrt(jnp.float32(n_state_neurons))
    A_weight = jax.random.uniform(
        k_a, (n_state_neurons, n_state_neurons), jnp.float32,
        minval=-bound, maxval=bound)

    ref = hcnn_forward_ref(Y, init_state, A_weight, forecast_horizon=forecast_horizon)

    # f32 path: exact vs. reference.
    out = hcnn_forward(Y, init_state, A_weight, forecast_horizon=forecast_horizon)
    out = jax.block_until_ready(out)
    assert out.shape == (past_horizon + forecast_horizon, batch, n_features_Y)
    assert jnp.allclose(out, ref, atol=1e-5, rtol=1e-5), "mismatch vs. JAX reference (f32)"

    # bf16 A-matmul + bf16 tanh path (MXU-native); state stays f32 -> small drift only.
    out_bf16 = jax.block_until_ready(
        hcnn_forward(Y, init_state, A_weight, forecast_horizon=forecast_horizon,
                     use_bf16_matmul=True))
    assert jnp.allclose(out_bf16, ref, atol=1e-1), "mismatch vs. JAX reference (bf16)"

    # TODO(synk): stochastic partial teacher forcing (teacher_forcing < 1 uses nn.Dropout),
    # the hcnn_gru_3_variant cell, sparsity masking of A, and the backward_full_Y /
    # ptf_in_backward gradient tricks are training/autograd-only behaviors; forward with
    # the default hcnn_cell and teacher_forcing=1 is exact.
    print("KERNEL_OK")
</pallas_src>

<mosaic_0001>
module attributes {stable_mosaic.version = 11 : i64} {
  func.func @_hcnn_kernel(%arg0: i32, %arg1: memref<8x8x128xf32, #tpu.memory_space<vmem>>, %arg2: memref<1x128xf32, #tpu.memory_space<vmem>>, %arg3: memref<128x128xf32, #tpu.memory_space<vmem>>, %arg4: memref<12x8x128xf32, #tpu.memory_space<vmem>>, %arg5: memref<8x128xf32, #tpu.memory_space<vmem>>) attributes {dimension_semantics = [#tpu.dimension_semantics<parallel>], iteration_bounds = array<i64: 1>, scalar_prefetch = 0 : i64, scratch_operands = 1 : i64, tpu.core_type = #tpu.core_type<tc>, window_params = [{transform_indices = @transform_0, window_bounds = array<i64: 8, 8, 128>}, {pipeline_mode = #tpu.pipeline_mode<synchronous>, transform_indices = @transform_1, window_bounds = array<i64: 1, 128>}, {pipeline_mode = #tpu.pipeline_mode<synchronous>, transform_indices = @transform_2, window_bounds = array<i64: 128, 128>}, {transform_indices = @transform_3, window_bounds = array<i64: 12, 8, 128>}]} {
    %c0 = arith.constant 0 : index
    %c0_0 = arith.constant 0 : index
    %0 = vector.load %arg2[%c0, %c0_0] : memref<1x128xf32, #tpu.memory_space<vmem>>, vector<1x128xf32>
    %1 = vector.shape_cast %0 : vector<1x128xf32> to vector<1x128xf32>
    %2 = vector.broadcast %1 : vector<1x128xf32> to vector<8x128xf32>
    %c0_1 = arith.constant 0 : index
    %c0_2 = arith.constant 0 : index
    %3 = vector.load %arg5[%c0_1, %c0_2] : memref<8x128xf32, #tpu.memory_space<vmem>>, vector<8x128xf32>
    tpu.vector_store %arg5[%c0_1, %c0_2], %2 {strides = array<i32>} : memref<8x128xf32, #tpu.memory_space<vmem>>, vector<8x128xf32>,
    %4 = tpu.iota {dimensions = array<i32: 1>} : vector<8x128xi32>
    %c4_i32 = arith.constant 4 : i32
    %5 = vector.broadcast %c4_i32 : i32 to vector<8x128xi32>
    %6 = arith.cmpi slt, %4, %5 : vector<8x128xi32>
    %c0_i32 = arith.constant 0 : i32
    %c0_3 = arith.constant 0 : index
    %c0_4 = arith.constant 0 : index
    %7 = vector.load %arg5[%c0_3, %c0_4] : memref<8x128xf32, #tpu.memory_space<vmem>>, vector<8x128xf32>
    %8 = arith.index_cast %c0_i32 : i32 to index
    %c0_5 = arith.constant 0 : index
    %c0_6 = arith.constant 0 : index
    %9 = vector.load %arg1[%8, %c0_5, %c0_6] : memref<8x8x128xf32, #tpu.memory_space<vmem>>, vector<1x8x128xf32>
    %10 = vector.shape_cast %9 : vector<1x8x128xf32> to vector<8x128xf32>
    %11 = arith.subf %7, %10 : vector<8x128xf32>
    %12 = arith.index_cast %c0_i32 : i32 to index
    %c0_7 = arith.constant 0 : index
    %c0_8 = arith.constant 0 : index
    %13 = vector.load %arg4[%12, %c0_7, %c0_8] : memref<12x8x128xf32, #tpu.memory_space<vmem>>, vector<1x8x128xf32>
    %14 = vector.shape_cast %13 : vector<1x8x128xf32> to vector<8x128xf32>
    %15 = vector.shape_cast %11 : vector<8x128xf32> to vector<1x8x128xf32>
    tpu.vector_store %arg4[%12, %c0_7, %c0_8], %15 {strides = array<i32>} : memref<12x8x128xf32, #tpu.memory_space<vmem>>, vector<1x8x128xf32>,
    %16 = arith.select %6, %10, %7 : vector<8x128xi1>, vector<8x128xf32>
    %17 = math.tanh %16 : vector<8x128xf32>
    %c0_9 = arith.constant 0 : index
    %c0_10 = arith.constant 0 : index
    %18 = vector.load %arg3[%c0_9, %c0_10] : memref<128x128xf32, #tpu.memory_space<vmem>>, vector<128x128xf32>
    %cst = arith.constant dense<0.000000e+00> : vector<8x128xf32>
    %19 = tpu.matmul %17, %18, %cst {dimension_numbers = #tpu.dot_dimension_numbers<[1], [0], [0], [1], [0, 0, 1, 1], [], []>} : vector<8x128xf32>, vector<128x128xf32>, vector<8x128xf32> -> vector<8x128xf32>
    %c0_11 = arith.constant 0 : index
    %c0_12 = arith.constant 0 : index
    %20 = vector.load %arg5[%c0_11, %c0_12] : memref<8x128xf32, #tpu.memory_space<vmem>>, vector<8x128xf32>
    tpu.vector_store %arg5[%c0_11, %c0_12], %19 {strides = array<i32>} : memref<8x128xf32, #tpu.memory_space<vmem>>, vector<8x128xf32>,
    %c1_i32 = arith.constant 1 : i32
    %c0_13 = arith.constant 0 : index
    %c0_14 = arith.constant 0 : index
    %21 = vector.load %arg5[%c0_13, %c0_14] : memref<8x128xf32, #tpu.memory_space<vmem>>, vector<8x128xf32>
    %22 = arith.index_cast %c1_i32 : i32 to index
    %c0_15 = arith.constant 0 : index
    %c0_16 = arith.constant 0 : index
    %23 = vector.load %arg1[%22, %c0_15, %c0_16] : memref<8x8x128xf32, #tpu.memory_space<vmem>>, vector<1x8x128xf32>
    %24 = vector.shape_cast %23 : vector<1x8x128xf32> to vector<8x128xf32>
    %25 = arith.subf %21, %24 : vector<8x128xf32>
    %26 = arith.index_cast %c1_i32 : i32 to index
    %c0_17 = arith.constant 0 : index
    %c0_18 = arith.constant 0 : index
    %27 = vector.load %arg4[%26, %c0_17, %c0_18] : memref<12x8x128xf32, #tpu.memory_space<vmem>>, vector<1x8x128xf32>
    %28 = vector.shape_cast %27 : vector<1x8x128xf32> to vector<8x128xf32>
    %29 = vector.shape_cast %25 : vector<8x128xf32> to vector<1x8x128xf32>
    tpu.vector_store %arg4[%26, %c0_17, %c0_18], %29 {strides = array<i32>} : memref<12x8x128xf32, #tpu.memory_space<vmem>>, vector<1x8x128xf32>,
    %30 = arith.select %6, %24, %21 : vector<8x128xi1>, vector<8x128xf32>
    %31 = math.tanh %30 : vector<8x128xf32>
    %c0_19 = arith.constant 0 : index
    %c0_20 = arith.constant 0 : index
    %32 = vector.load %arg3[%c0_19, %c0_20] : memref<128x128xf32, #tpu.memory_space<vmem>>, vector<128x128xf32>
    %cst_21 = arith.constant dense<0.000000e+00> : vector<8x128xf32>
    %33 = tpu.matmul %31, %32, %cst_21 {dimension_numbers = #tpu.dot_dimension_numbers<[1], [0], [0], [1], [0, 0, 1, 1], [], []>} : vector<8x128xf32>, vector<128x128xf32>, vector<8x128xf32> -> vector<8x128xf32>
    %c0_22 = arith.constant 0 : index
    %c0_23 = arith.constant 0 : index
    %34 = vector.load %arg5[%c0_22, %c0_23] : memref<8x128xf32, #tpu.memory_space<vmem>>, vector<8x128xf32>
    tpu.vector_store %arg5[%c0_22, %c0_23], %33 {strides = array<i32>} : memref<8x128xf32, #tpu.memory_space<vmem>>, vector<8x128xf32>,
    %c2_i32 = arith.constant 2 : i32
    %c0_24 = arith.constant 0 : index
    %c0_25 = arith.constant 0 : index
    %35 = vector.load %arg5[%c0_24, %c0_25] : memref<8x128xf32, #tpu.memory_space<vmem>>, vector<8x128xf32>
    %36 = arith.index_cast %c2_i32 : i32 to index
    %c0_26 = arith.constant 0 : index
    %c0_27 = arith.constant 0 : index
    %37 = vector.load %arg1[%36, %c0_26, %c0_27] : memref<8x8x128xf32, #tpu.memory_space<vmem>>, vector<1x8x128xf32>
    %38 = vector.shape_cast %37 : vector<1x8x128xf32> to vector<8x128xf32>
    %39 = arith.subf %35, %38 : vector<8x128xf32>
    %40 = arith.index_cast %c2_i32 : i32 to index
    %c0_28 = arith.constant 0 : index
    %c0_29 = arith.constant 0 : index
    %41 = vector.load %arg4[%40, %c0_28, %c0_29] : memref<12x8x128xf32, #tpu.memory_space<vmem>>, vector<1x8x128xf32>
    %42 = vector.shape_cast %41 : vector<1x8x128xf32> to vector<8x128xf32>
    %43 = vector.shape_cast %39 : vector<8x128xf32> to vector<1x8x128xf32>
    tpu.vector_store %arg4[%40, %c0_28, %c0_29], %43 {strides = array<i32>} : memref<12x8x128xf32, #tpu.memory_space<vmem>>, vector<1x8x128xf32>,
    %44 = arith.select %6, %38, %35 : vector<8x128xi1>, vector<8x128xf32>
    %45 = math.tanh %44 : vector<8x128xf32>
    %c0_30 = arith.constant 0 : index
    %c0_31 = arith.constant 0 : index
    %46 = vector.load %arg3[%c0_30, %c0_31] : memref<128x128xf32, #tpu.memory_space<vmem>>, vector<128x128xf32>
    %cst_32 = arith.constant dense<0.000000e+00> : vector<8x128xf32>
    %47 = tpu.matmul %45, %46, %cst_32 {dimension_numbers = #tpu.dot_dimension_numbers<[1], [0], [0], [1], [0, 0, 1, 1], [], []>} : vector<8x128xf32>, vector<128x128xf32>, vector<8x128xf32> -> vector<8x128xf32>
    %c0_33 = arith.constant 0 : index
    %c0_34 = arith.constant 0 : index
    %48 = vector.load %arg5[%c0_33, %c0_34] : memref<8x128xf32, #tpu.memory_space<vmem>>, vector<8x128xf32>
    tpu.vector_store %arg5[%c0_33, %c0_34], %47 {strides = array<i32>} : memref<8x128xf32, #tpu.memory_space<vmem>>, vector<8x128xf32>,
    %c3_i32 = arith.constant 3 : i32
    %c0_35 = arith.constant 0 : index
    %c0_36 = arith.constant 0 : index
    %49 = vector.load %arg5[%c0_35, %c0_36] : memref<8x128xf32, #tpu.memory_space<vmem>>, vector<8x128xf32>
    %50 = arith.index_cast %c3_i32 : i32 to index
    %c0_37 = arith.constant 0 : index
    %c0_38 = arith.constant 0 : index
    %51 = vector.load %arg1[%50, %c0_37, %c0_38] : memref<8x8x128xf32, #tpu.memory_space<vmem>>, vector<1x8x128xf32>
    %52 = vector.shape_cast %51 : vector<1x8x128xf32> to vector<8x128xf32>
    %53 = arith.subf %49, %52 : vector<8x128xf32>
    %54 = arith.index_cast %c3_i32 : i32 to index
    %c0_39 = arith.constant 0 : index
    %c0_40 = arith.constant 0 : index
    %55 = vector.load %arg4[%54, %c0_39, %c0_40] : memref<12x8x128xf32, #tpu.memory_space<vmem>>, vector<1x8x128xf32>
    %56 = vector.shape_cast %55 : vector<1x8x128xf32> to vector<8x128xf32>
    %57 = vector.shape_cast %53 : vector<8x128xf32> to vector<1x8x128xf32>
    tpu.vector_store %arg4[%54, %c0_39, %c0_40], %57 {strides = array<i32>} : memref<12x8x128xf32, #tpu.memory_space<vmem>>, vector<1x8x128xf32>,
    %58 = arith.select %6, %52, %49 : vector<8x128xi1>, vector<8x128xf32>
    %59 = math.tanh %58 : vector<8x128xf32>
    %c0_41 = arith.constant 0 : index
    %c0_42 = arith.constant 0 : index
    %60 = vector.load %arg3[%c0_41, %c0_42] : memref<128x128xf32, #tpu.memory_space<vmem>>, vector<128x128xf32>
    %cst_43 = arith.constant dense<0.000000e+00> : vector<8x128xf32>
    %61 = tpu.matmul %59, %60, %cst_43 {dimension_numbers = #tpu.dot_dimension_numbers<[1], [0], [0], [1], [0, 0, 1, 1], [], []>} : vector<8x128xf32>, vector<128x128xf32>, vector<8x128xf32> -> vector<8x128xf32>
    %c0_44 = arith.constant 0 : index
    %c0_45 = arith.constant 0 : index
    %62 = vector.load %arg5[%c0_44, %c0_45] : memref<8x128xf32, #tpu.memory_space<vmem>>, vector<8x128xf32>
    tpu.vector_store %arg5[%c0_44, %c0_45], %61 {strides = array<i32>} : memref<8x128xf32, #tpu.memory_space<vmem>>, vector<8x128xf32>,
    %c4_i32_46 = arith.constant 4 : i32
    %c0_47 = arith.constant 0 : index
    %c0_48 = arith.constant 0 : index
    %63 = vector.load %arg5[%c0_47, %c0_48] : memref<8x128xf32, #tpu.memory_space<vmem>>, vector<8x128xf32>
    %64 = arith.index_cast %c4_i32_46 : i32 to index
    %c0_49 = arith.constant 0 : index
    %c0_50 = arith.constant 0 : index
    %65 = vector.load %arg1[%64, %c0_49, %c0_50] : memref<8x8x128xf32, #tpu.memory_space<vmem>>, vector<1x8x128xf32>
    %66 = vector.shape_cast %65 : vector<1x8x128xf32> to vector<8x128xf32>
    %67 = arith.subf %63, %66 : vector<8x128xf32>
    %68 = arith.index_cast %c4_i32_46 : i32 to index
    %c0_51 = arith.constant 0 : index
    %c0_52 = arith.constant 0 : index
    %69 = vector.load %arg4[%68, %c0_51, %c0_52] : memref<12x8x128xf32, #tpu.memory_space<vmem>>, vector<1x8x128xf32>
    %70 = vector.shape_cast %69 : vector<1x8x128xf32> to vector<8x128xf32>
    %71 = vector.shape_cast %67 : vector<8x128xf32> to vector<1x8x128xf32>
    tpu.vector_store %arg4[%68, %c0_51, %c0_52], %71 {strides = array<i32>} : memref<12x8x128xf32, #tpu.memory_space<vmem>>, vector<1x8x128xf32>,
    %72 = arith.select %6, %66, %63 : vector<8x128xi1>, vector<8x128xf32>
    %73 = math.tanh %72 : vector<8x128xf32>
    %c0_53 = arith.constant 0 : index
    %c0_54 = arith.constant 0 : index
    %74 = vector.load %arg3[%c0_53, %c0_54] : memref<128x128xf32, #tpu.memory_space<vmem>>, vector<128x128xf32>
    %cst_55 = arith.constant dense<0.000000e+00> : vector<8x128xf32>
    %75 = tpu.matmul %73, %74, %cst_55 {dimension_numbers = #tpu.dot_dimension_numbers<[1], [0], [0], [1], [0, 0, 1, 1], [], []>} : vector<8x128xf32>, vector<128x128xf32>, vector<8x128xf32> -> vector<8x128xf32>
    %c0_56 = arith.constant 0 : index
    %c0_57 = arith.constant 0 : index
    %76 = vector.load %arg5[%c0_56, %c0_57] : memref<8x128xf32, #tpu.memory_space<vmem>>, vector<8x128xf32>
    tpu.vector_store %arg5[%c0_56, %c0_57], %75 {strides = array<i32>} : memref<8x128xf32, #tpu.memory_space<vmem>>, vector<8x128xf32>,
    %c5_i32 = arith.constant 5 : i32
    %c0_58 = arith.constant 0 : index
    %c0_59 = arith.constant 0 : index
    %77 = vector.load %arg5[%c0_58, %c0_59] : memref<8x128xf32, #tpu.memory_space<vmem>>, vector<8x128xf32>
    %78 = arith.index_cast %c5_i32 : i32 to index
    %c0_60 = arith.constant 0 : index
    %c0_61 = arith.constant 0 : index
    %79 = vector.load %arg1[%78, %c0_60, %c0_61] : memref<8x8x128xf32, #tpu.memory_space<vmem>>, vector<1x8x128xf32>
    %80 = vector.shape_cast %79 : vector<1x8x128xf32> to vector<8x128xf32>
    %81 = arith.subf %77, %80 : vector<8x128xf32>
    %82 = arith.index_cast %c5_i32 : i32 to index
    %c0_62 = arith.constant 0 : index
    %c0_63 = arith.constant 0 : index
    %83 = vector.load %arg4[%82, %c0_62, %c0_63] : memref<12x8x128xf32, #tpu.memory_space<vmem>>, vector<1x8x128xf32>
    %84 = vector.shape_cast %83 : vector<1x8x128xf32> to vector<8x128xf32>
    %85 = vector.shape_cast %81 : vector<8x128xf32> to vector<1x8x128xf32>
    tpu.vector_store %arg4[%82, %c0_62, %c0_63], %85 {strides = array<i32>} : memref<12x8x128xf32, #tpu.memory_space<vmem>>, vector<1x8x128xf32>,
    %86 = arith.select %6, %80, %77 : vector<8x128xi1>, vector<8x128xf32>
    %87 = math.tanh %86 : vector<8x128xf32>
    %c0_64 = arith.constant 0 : index
    %c0_65 = arith.constant 0 : index
    %88 = vector.load %arg3[%c0_64, %c0_65] : memref<128x128xf32, #tpu.memory_space<vmem>>, vector<128x128xf32>
    %cst_66 = arith.constant dense<0.000000e+00> : vector<8x128xf32>
    %89 = tpu.matmul %87, %88, %cst_66 {dimension_numbers = #tpu.dot_dimension_numbers<[1], [0], [0], [1], [0, 0, 1, 1], [], []>} : vector<8x128xf32>, vector<128x128xf32>, vector<8x128xf32> -> vector<8x128xf32>
    %c0_67 = arith.constant 0 : index
    %c0_68 = arith.constant 0 : index
    %90 = vector.load %arg5[%c0_67, %c0_68] : memref<8x128xf32, #tpu.memory_space<vmem>>, vector<8x128xf32>
    tpu.vector_store %arg5[%c0_67, %c0_68], %89 {strides = array<i32>} : memref<8x128xf32, #tpu.memory_space<vmem>>, vector<8x128xf32>,
    %c6_i32 = arith.constant 6 : i32
    %c0_69 = arith.constant 0 : index
    %c0_70 = arith.constant 0 : index
    %91 = vector.load %arg5[%c0_69, %c0_70] : memref<8x128xf32, #tpu.memory_space<vmem>>, vector<8x128xf32>
    %92 = arith.index_cast %c6_i32 : i32 to index
    %c0_71 = arith.constant 0 : index
    %c0_72 = arith.constant 0 : index
    %93 = vector.load %arg1[%92, %c0_71, %c0_72] : memref<8x8x128xf32, #tpu.memory_space<vmem>>, vector<1x8x128xf32>
    %94 = vector.shape_cast %93 : vector<1x8x128xf32> to vector<8x128xf32>
    %95 = arith.subf %91, %94 : vector<8x128xf32>
    %96 = arith.index_cast %c6_i32 : i32 to index
    %c0_73 = arith.constant 0 : index
    %c0_74 = arith.constant 0 : index
    %97 = vector.load %arg4[%96, %c0_73, %c0_74] : memref<12x8x128xf32, #tpu.memory_space<vmem>>, vector<1x8x128xf32>
    %98 = vector.shape_cast %97 : vector<1x8x128xf32> to vector<8x128xf32>
    %99 = vector.shape_cast %95 : vector<8x128xf32> to vector<1x8x128xf32>
    tpu.vector_store %arg4[%96, %c0_73, %c0_74], %99 {strides = array<i32>} : memref<12x8x128xf32, #tpu.memory_space<vmem>>, vector<1x8x128xf32>,
    %100 = arith.select %6, %94, %91 : vector<8x128xi1>, vector<8x128xf32>
    %101 = math.tanh %100 : vector<8x128xf32>
    %c0_75 = arith.constant 0 : index
    %c0_76 = arith.constant 0 : index
    %102 = vector.load %arg3[%c0_75, %c0_76] : memref<128x128xf32, #tpu.memory_space<vmem>>, vector<128x128xf32>
    %cst_77 = arith.constant dense<0.000000e+00> : vector<8x128xf32>
    %103 = tpu.matmul %101, %102, %cst_77 {dimension_numbers = #tpu.dot_dimension_numbers<[1], [0], [0], [1], [0, 0, 1, 1], [], []>} : vector<8x128xf32>, vector<128x128xf32>, vector<8x128xf32> -> vector<8x128xf32>
    %c0_78 = arith.constant 0 : index
    %c0_79 = arith.constant 0 : index
    %104 = vector.load %arg5[%c0_78, %c0_79] : memref<8x128xf32, #tpu.memory_space<vmem>>, vector<8x128xf32>
    tpu.vector_store %arg5[%c0_78, %c0_79], %103 {strides = array<i32>} : memref<8x128xf32, #tpu.memory_space<vmem>>, vector<8x128xf32>,
    %c7_i32 = arith.constant 7 : i32
    %c0_80 = arith.constant 0 : index
    %c0_81 = arith.constant 0 : index
    %105 = vector.load %arg5[%c0_80, %c0_81] : memref<8x128xf32, #tpu.memory_space<vmem>>, vector<8x128xf32>
    %106 = arith.index_cast %c7_i32 : i32 to index
    %c0_82 = arith.constant 0 : index
    %c0_83 = arith.constant 0 : index
    %107 = vector.load %arg1[%106, %c0_82, %c0_83] : memref<8x8x128xf32, #tpu.memory_space<vmem>>, vector<1x8x128xf32>
    %108 = vector.shape_cast %107 : vector<1x8x128xf32> to vector<8x128xf32>
    %109 = arith.subf %105, %108 : vector<8x128xf32>
    %110 = arith.index_cast %c7_i32 : i32 to index
    %c0_84 = arith.constant 0 : index
    %c0_85 = arith.constant 0 : index
    %111 = vector.load %arg4[%110, %c0_84, %c0_85] : memref<12x8x128xf32, #tpu.memory_space<vmem>>, vector<1x8x128xf32>
    %112 = vector.shape_cast %111 : vector<1x8x128xf32> to vector<8x128xf32>
    %113 = vector.shape_cast %109 : vector<8x128xf32> to vector<1x8x128xf32>
    tpu.vector_store %arg4[%110, %c0_84, %c0_85], %113 {strides = array<i32>} : memref<12x8x128xf32, #tpu.memory_space<vmem>>, vector<1x8x128xf32>,
    %114 = arith.select %6, %108, %105 : vector<8x128xi1>, vector<8x128xf32>
    %115 = math.tanh %114 : vector<8x128xf32>
    %c0_86 = arith.constant 0 : index
    %c0_87 = arith.constant 0 : index
    %116 = vector.load %arg3[%c0_86, %c0_87] : memref<128x128xf32, #tpu.memory_space<vmem>>, vector<128x128xf32>
    %cst_88 = arith.constant dense<0.000000e+00> : vector<8x128xf32>
    %117 = tpu.matmul %115, %116, %cst_88 {dimension_numbers = #tpu.dot_dimension_numbers<[1], [0], [0], [1], [0, 0, 1, 1], [], []>} : vector<8x128xf32>, vector<128x128xf32>, vector<8x128xf32> -> vector<8x128xf32>
    %c0_89 = arith.constant 0 : index
    %c0_90 = arith.constant 0 : index
    %118 = vector.load %arg5[%c0_89, %c0_90] : memref<8x128xf32, #tpu.memory_space<vmem>>, vector<8x128xf32>
    tpu.vector_store %arg5[%c0_89, %c0_90], %117 {strides = array<i32>} : memref<8x128xf32, #tpu.memory_space<vmem>>, vector<8x128xf32>,
    %c8_i32 = arith.constant 8 : i32
    %c0_i32_91 = arith.constant 0 : i32
    %c0_92 = arith.constant 0 : index
    %c0_93 = arith.constant 0 : index
    %119 = vector.load %arg5[%c0_92, %c0_93] : memref<8x128xf32, #tpu.memory_space<vmem>>, vector<8x128xf32>
    %c8_i32_94 = arith.constant 8 : i32
    %120 = arith.addi %c8_i32_94, %c0_i32_91 : i32
    %121 = arith.index_cast %120 : i32 to index
    %c0_95 = arith.constant 0 : index
    %c0_96 = arith.constant 0 : index
    %122 = vector.load %arg4[%121, %c0_95, %c0_96] : memref<12x8x128xf32, #tpu.memory_space<vmem>>, vector<1x8x128xf32>
    %123 = vector.shape_cast %122 : vector<1x8x128xf32> to vector<8x128xf32>
    %124 = vector.shape_cast %119 : vector<8x128xf32> to vector<1x8x128xf32>
    tpu.vector_store %arg4[%121, %c0_95, %c0_96], %124 {strides = array<i32>} : memref<12x8x128xf32, #tpu.memory_space<vmem>>, vector<1x8x128xf32>,
    %125 = math.tanh %119 : vector<8x128xf32>
    %c0_97 = arith.constant 0 : index
    %c0_98 = arith.constant 0 : index
    %126 = vector.load %arg3[%c0_97, %c0_98] : memref<128x128xf32, #tpu.memory_space<vmem>>, vector<128x128xf32>
    %cst_99 = arith.constant dense<0.000000e+00> : vector<8x128xf32>
    %127 = tpu.matmul %125, %126, %cst_99 {dimension_numbers = #tpu.dot_dimension_numbers<[1], [0], [0], [1], [0, 0, 1, 1], [], []>} : vector<8x128xf32>, vector<128x128xf32>, vector<8x128xf32> -> vector<8x128xf32>
    %c0_100 = arith.constant 0 : index
    %c0_101 = arith.constant 0 : index
    %128 = vector.load %arg5[%c0_100, %c0_101] : memref<8x128xf32, #tpu.memory_space<vmem>>, vector<8x128xf32>
    tpu.vector_store %arg5[%c0_100, %c0_101], %127 {strides = array<i32>} : memref<8x128xf32, #tpu.memory_space<vmem>>, vector<8x128xf32>,
    %c1_i32_102 = arith.constant 1 : i32
    %c0_103 = arith.constant 0 : index
    %c0_104 = arith.constant 0 : index
    %129 = vector.load %arg5[%c0_103, %c0_104] : memref<8x128xf32, #tpu.memory_space<vmem>>, vector<8x128xf32>
    %c8_i32_105 = arith.constant 8 : i32
    %130 = arith.addi %c8_i32_105, %c1_i32_102 : i32
    %131 = arith.index_cast %130 : i32 to index
    %c0_106 = arith.constant 0 : index
    %c0_107 = arith.constant 0 : index
    %132 = vector.load %arg4[%131, %c0_106, %c0_107] : memref<12x8x128xf32, #tpu.memory_space<vmem>>, vector<1x8x128xf32>
    %133 = vector.shape_cast %132 : vector<1x8x128xf32> to vector<8x128xf32>
    %134 = vector.shape_cast %129 : vector<8x128xf32> to vector<1x8x128xf32>
    tpu.vector_store %arg4[%131, %c0_106, %c0_107], %134 {strides = array<i32>} : memref<12x8x128xf32, #tpu.memory_space<vmem>>, vector<1x8x128xf32>,
    %135 = math.tanh %129 : vector<8x128xf32>
    %c0_108 = arith.constant 0 : index
    %c0_109 = arith.constant 0 : index
    %136 = vector.load %arg3[%c0_108, %c0_109] : memref<128x128xf32, #tpu.memory_space<vmem>>, vector<128x128xf32>
    %cst_110 = arith.constant dense<0.000000e+00> : vector<8x128xf32>
    %137 = tpu.matmul %135, %136, %cst_110 {dimension_numbers = #tpu.dot_dimension_numbers<[1], [0], [0], [1], [0, 0, 1, 1], [], []>} : vector<8x128xf32>, vector<128x128xf32>, vector<8x128xf32> -> vector<8x128xf32>
    %c0_111 = arith.constant 0 : index
    %c0_112 = arith.constant 0 : index
    %138 = vector.load %arg5[%c0_111, %c0_112] : memref<8x128xf32, #tpu.memory_space<vmem>>, vector<8x128xf32>
    tpu.vector_store %arg5[%c0_111, %c0_112], %137 {strides = array<i32>} : memref<8x128xf32, #tpu.memory_space<vmem>>, vector<8x128xf32>,
    %c2_i32_113 = arith.constant 2 : i32
    %c0_114 = arith.constant 0 : index
    %c0_115 = arith.constant 0 : index
    %139 = vector.load %arg5[%c0_114, %c0_115] : memref<8x128xf32, #tpu.memory_space<vmem>>, vector<8x128xf32>
    %c8_i32_116 = arith.constant 8 : i32
    %140 = arith.addi %c8_i32_116, %c2_i32_113 : i32
    %141 = arith.index_cast %140 : i32 to index
    %c0_117 = arith.constant 0 : index
    %c0_118 = arith.constant 0 : index
    %142 = vector.load %arg4[%141, %c0_117, %c0_118] : memref<12x8x128xf32, #tpu.memory_space<vmem>>, vector<1x8x128xf32>
    %143 = vector.shape_cast %142 : vector<1x8x128xf32> to vector<8x128xf32>
    %144 = vector.shape_cast %139 : vector<8x128xf32> to vector<1x8x128xf32>
    tpu.vector_store %arg4[%141, %c0_117, %c0_118], %144 {strides = array<i32>} : memref<12x8x128xf32, #tpu.memory_space<vmem>>, vector<1x8x128xf32>,
    %145 = math.tanh %139 : vector<8x128xf32>
    %c0_119 = arith.constant 0 : index
    %c0_120 = arith.constant 0 : index
    %146 = vector.load %arg3[%c0_119, %c0_120] : memref<128x128xf32, #tpu.memory_space<vmem>>, vector<128x128xf32>
    %cst_121 = arith.constant dense<0.000000e+00> : vector<8x128xf32>
    %147 = tpu.matmul %145, %146, %cst_121 {dimension_numbers = #tpu.dot_dimension_numbers<[1], [0], [0], [1], [0, 0, 1, 1], [], []>} : vector<8x128xf32>, vector<128x128xf32>, vector<8x128xf32> -> vector<8x128xf32>
    %c0_122 = arith.constant 0 : index
    %c0_123 = arith.constant 0 : index
    %148 = vector.load %arg5[%c0_122, %c0_123] : memref<8x128xf32, #tpu.memory_space<vmem>>, vector<8x128xf32>
    tpu.vector_store %arg5[%c0_122, %c0_123], %147 {strides = array<i32>} : memref<8x128xf32, #tpu.memory_space<vmem>>, vector<8x128xf32>,
    %c3_i32_124 = arith.constant 3 : i32
    %c0_125 = arith.constant 0 : index
    %c0_126 = arith.constant 0 : index
    %149 = vector.load %arg5[%c0_125, %c0_126] : memref<8x128xf32, #tpu.memory_space<vmem>>, vector<8x128xf32>
    %c8_i32_127 = arith.constant 8 : i32
    %150 = arith.addi %c8_i32_127, %c3_i32_124 : i32
    %151 = arith.index_cast %150 : i32 to index
    %c0_128 = arith.constant 0 : index
    %c0_129 = arith.constant 0 : index
    %152 = vector.load %arg4[%151, %c0_128, %c0_129] : memref<12x8x128xf32, #tpu.memory_space<vmem>>, vector<1x8x128xf32>
    %153 = vector.shape_cast %152 : vector<1x8x128xf32> to vector<8x128xf32>
    %154 = vector.shape_cast %149 : vector<8x128xf32> to vector<1x8x128xf32>
    tpu.vector_store %arg4[%151, %c0_128, %c0_129], %154 {strides = array<i32>} : memref<12x8x128xf32, #tpu.memory_space<vmem>>, vector<1x8x128xf32>,
    %155 = math.tanh %149 : vector<8x128xf32>
    %c0_130 = arith.constant 0 : index
    %c0_131 = arith.constant 0 : index
    %156 = vector.load %arg3[%c0_130, %c0_131] : memref<128x128xf32, #tpu.memory_space<vmem>>, vector<128x128xf32>
    %cst_132 = arith.constant dense<0.000000e+00> : vector<8x128xf32>
    %157 = tpu.matmul %155, %156, %cst_132 {dimension_numbers = #tpu.dot_dimension_numbers<[1], [0], [0], [1], [0, 0, 1, 1], [], []>} : vector<8x128xf32>, vector<128x128xf32>, vector<8x128xf32> -> vector<8x128xf32>
    %c0_133 = arith.constant 0 : index
    %c0_134 = arith.constant 0 : index
    %158 = vector.load %arg5[%c0_133, %c0_134] : memref<8x128xf32, #tpu.memory_space<vmem>>, vector<8x128xf32>
    tpu.vector_store %arg5[%c0_133, %c0_134], %157 {strides = array<i32>} : memref<8x128xf32, #tpu.memory_space<vmem>>, vector<8x128xf32>,
    %c4_i32_135 = arith.constant 4 : i32
    return
  }
  func.func @transform_0(%arg0: i32) -> (i32, i32, i32) {
    %c0_i32 = arith.constant 0 : i32
    %c0_i32_0 = arith.constant 0 : i32
    %c0_i32_1 = arith.constant 0 : i32
    return %c0_i32, %arg0, %c0_i32_0 : i32, i32, i32
  }
  func.func @transform_1(%arg0: i32) -> (i32, i32) {
    %c0_i32 = arith.constant 0 : i32
    %c0_i32_0 = arith.constant 0 : i32
    %c0_i32_1 = arith.constant 0 : i32
    return %c0_i32, %c0_i32_0 : i32, i32
  }
  func.func @transform_2(%arg0: i32) -> (i32, i32) {
    %c0_i32 = arith.constant 0 : i32
    %c0_i32_0 = arith.constant 0 : i32
    %c0_i32_1 = arith.constant 0 : i32
    return %c0_i32, %c0_i32_0 : i32, i32
  }
  func.func @transform_3(%arg0: i32) -> (i32, i32, i32) {
    %c0_i32 = arith.constant 0 : i32
    %c0_i32_0 = arith.constant 0 : i32
    %c0_i32_1 = arith.constant 0 : i32
    return %c0_i32, %arg0, %c0_i32_0 : i32, i32, i32
  }
}

</mosaic_0001>

<llo_original>
// kernel: tpu_custom_call.1
$region0: #{tpu_custom_call.1}
  #allocation0 [shape = 'u32[]', space=smem, size = 0x4, offset = 0x4, fixed_abs, tag = 'smem constant byte address 0x4 - core index']
  #allocation1 [shape = 'u32[144,128]{1,0:T(1,128)}', space=vmem, size = 0x12000, scoped, tag = 'internal scratch']
  #allocation2 [shape = 'f32[8,128]{1,0:T(8,128)}', space=vmem, size = 0x1000, scoped, tag = 'scratch operand']
  %s0 = inlined_call_operand.hbm [shape: f32[8,8,128], index: 0, kind: input, shape index: {}]
  %s1 = inlined_call_operand.vmem [shape: f32[1,128], index: 1, kind: input, shape index: {}]
  %s2 = inlined_call_operand.hbm [shape: f32[128,128], index: 2, kind: input, shape index: {}]
  %s3 = inlined_call_operand.hbm [shape: f32[12,8,128], index: 3, kind: output, shape index: {}]
  %s4 = sld [smem:[#allocation0]]
  $region30: #{tpu_custom_call.1} parent=0
    _
  %s6 = ssub.s32 1, %s4
  %s7 = scalar_select 0, %s6, %s4
  $region1: #{tpu_custom_call.1} parent=0
    #allocation3 [shape = 'u8[32768]{0}', space=vmem, size = 0x8000, scoped, tag = 'input window, operand 0, single buffered']
    #allocation4 [shape = 's32[1]{0}', space=sflag, size = 0x4, scoped, tag = 'scoped memory for tpu_custom_call.1']
    #allocation5 [shape = 's32[1]{0}', space=sflag, size = 0x4, scoped, tag = 'scoped memory for tpu_custom_call.1']
    #allocation6 [shape = 'u8[65536]{0}', space=vmem, size = 0x10000, scoped, tag = 'input window, operand 2, single buffered']
    #allocation7 [shape = 's32[1]{0}', space=sflag, size = 0x4, scoped, tag = 'scoped memory for tpu_custom_call.1']
    #allocation8 [shape = 'u8[49152]{0}', space=vmem, size = 0xc000, scoped, tag = 'output window, operand 0, single buffered']
    %8 = vsyncpa [#allocation4], 0
    %9 = vsyncpa [#allocation7], 0
    %10 = vsyncpa [#allocation5], 0
    // Predicated region
    $region2: #{tpu_custom_call.1} parent=1 // pred_check
      _
    $region3: #{tpu_custom_call.1} parent=1 // pred_check_branch
      %12 = sbr.rel (0) target = $region5
    $region4: #{tpu_custom_call.1} parent=1 // pred_region
      %s14 = ssub.s32 1024, 1024
      %15 = vsyncadd [#allocation4], %s14
      %s16 = sshll.u32 [#allocation3], 4
      %s17 = int_to_ptr.vmem [resolvable:$true] %s16
      %22 = dma.hbm_to_vmem [thread:$0]  %s0, 1024, %s17, [#allocation4], 128, 128, 8
    $region5: #{tpu_custom_call.1} parent=1 // pred_fallthru
      _
    // Predicated region
    $region6: #{tpu_custom_call.1} parent=1 // pred_check
      _
    $region7: #{tpu_custom_call.1} parent=1 // pred_check_branch
      %24 = sbr.rel (0) target = $region9
    $region8: #{tpu_custom_call.1} parent=1 // pred_region
      _
    $region9: #{tpu_custom_call.1} parent=1 // pred_fallthru
      _
    // Predicated region
    $region10: #{tpu_custom_call.1} parent=1 // pred_check
      _
    $region11: #{tpu_custom_call.1} parent=1 // pred_check_branch
      %26 = sbr.rel (0) target = $region13
    $region12: #{tpu_custom_call.1} parent=1 // pred_region
      %s28 = ssub.s32 2048, 2048
      %29 = vsyncadd [#allocation7], %s28
      %s30 = sshll.u32 [#allocation6], 4
      %s31 = int_to_ptr.vmem [resolvable:$true] %s30
      %36 = dma.hbm_to_vmem [thread:$0]  %s2, 2048, %s31, [#allocation7], 128, 128, 8
    $region13: #{tpu_custom_call.1} parent=1 // pred_fallthru
      _
    // Predicated region
    $region14: #{tpu_custom_call.1} parent=1 // pred_check
      _
    $region15: #{tpu_custom_call.1} parent=1 // pred_check_branch
      %38 = sbr.rel (0) target = $region17
    $region16: #{tpu_custom_call.1} parent=1 // pred_region
      %39 = dma.done [#allocation4], 1024
    $region17: #{tpu_custom_call.1} parent=1 // pred_fallthru
      _
    // Predicated region
    $region18: #{tpu_custom_call.1} parent=1 // pred_check
      _
    $region19: #{tpu_custom_call.1} parent=1 // pred_check_branch
      %41 = sbr.rel (0) target = $region21
    $region20: #{tpu_custom_call.1} parent=1 // pred_region
      %42 = dma.done [#allocation7], 2048
    $region21: #{tpu_custom_call.1} parent=1 // pred_fallthru
      _
    %v43 = vld [vmem:[%s1] sm:$0x1]
    %v45 = vlaneseq
    %v46 = vshrl.u32 %v45, 7
    %v47 = vsub.s32 0, %v46
    %v48 = vrot.slane %v43, %v47
    %50 = vst [vmem:[#allocation2] sm:$0xff] %v48
    %v51 = vlaneseq
    %v52 = vand.u32 %v51, 127
    %vm53 = vcmp.lt.s32.totalorder %v52, 4
    %v54 = vld [vmem:[#allocation2] sm:$0xff]
    %v55 = vld [vmem:[#allocation3] sm:$0xff]
    %v56 = vsub.f32 %v54, %v55
    %57 = vst [vmem:[#allocation8] sm:$0xff] %v56
    %v58 = vsel %vm53, %v55, %v54
    %v59 = vtanh.pop %v58
    %v60 = vld [vmem:[#allocation6] sm:$0xff]
    %v61 = vld [vmem:[#allocation6 + $0x8] sm:$0xff]
    %v62 = vld [vmem:[#allocation6 + $0x10] sm:$0xff]
    %v63 = vld [vmem:[#allocation6 + $0x18] sm:$0xff]
    %v64 = vld [vmem:[#allocation6 + $0x20] sm:$0xff]
    %v65 = vld [vmem:[#allocation6 + $0x28] sm:$0xff]
    %v66 = vld [vmem:[#allocation6 + $0x30] sm:$0xff]
    %v67 = vld [vmem:[#allocation6 + $0x38] sm:$0xff]
    %v68 = vld [vmem:[#allocation6 + $0x40] sm:$0xff]
    %v69 = vld [vmem:[#allocation6 + $0x48] sm:$0xff]
    %v70 = vld [vmem:[#allocation6 + $0x50] sm:$0xff]
    %v71 = vld [vmem:[#allocation6 + $0x58] sm:$0xff]
    %v72 = vld [vmem:[#allocation6 + $0x60] sm:$0xff]
    %v73 = vld [vmem:[#allocation6 + $0x68] sm:$0xff]
    %v74 = vld [vmem:[#allocation6 + $0x70] sm:$0xff]
    %v75 = vld [vmem:[#allocation6 + $0x78] sm:$0xff]
    %76 = vmatprep.subr.mxu0 0.0
    %77 = vmatpush1.msra.mxu0 %v75
    %78 = vmatprep.subr.mxu0 0.0
    %79 = vmatpush1.msra.mxu0 %v74
    %80 = vmatprep.subr.mxu0 0.0
    %81 = vmatpush1.msra.mxu0 %v73
    %82 = vmatprep.subr.mxu0 0.0
    %83 = vmatpush1.msra.mxu0 %v72
    %84 = vmatprep.subr.mxu0 0.0
    %85 = vmatpush1.msra.mxu0 %v71
    %86 = vmatprep.subr.mxu0 0.0
    %87 = vmatpush1.msra.mxu0 %v70
    %88 = vmatprep.subr.mxu0 0.0
    %89 = vmatpush1.msra.mxu0 %v69
    %90 = vmatprep.subr.mxu0 0.0
    %91 = vmatpush1.msra.mxu0 %v68
    %92 = vmatprep.subr.mxu0 0.0
    %93 = vmatpush1.msra.mxu0 %v67
    %94 = vmatprep.subr.mxu0 0.0
    %95 = vmatpush1.msra.mxu0 %v66
    %96 = vmatprep.subr.mxu0 0.0
    %97 = vmatpush1.msra.mxu0 %v65
    %98 = vmatprep.subr.mxu0 0.0
    %99 = vmatpush1.msra.mxu0 %v64
    %100 = vmatprep.subr.mxu0 0.0
    %101 = vmatpush1.msra.mxu0 %v63
    %102 = vmatprep.subr.mxu0 0.0
    %103 = vmatpush1.msra.mxu0 %v62
    %104 = vmatprep.subr.mxu0 0.0
    %105 = vmatpush1.msra.mxu0 %v61
    %106 = vmatprep.subr.mxu0 0.0
    %107 = vmatpush1.msra.mxu0 %v60
    %108 = vmatprep.subr.mxu0 0.0
    %109 = vmatpush2.msra.mxu0 0.0
    %110 = vmatprep.subr.mxu0 0.0
    %111 = vmatpush2.msra.mxu0 0.0
    %112 = vmatprep.subr.mxu0 0.0
    %113 = vmatpush2.msra.mxu0 0.0
    %114 = vmatprep.subr.mxu0 0.0
    %115 = vmatpush2.msra.mxu0 0.0
    %116 = vmatprep.subr.mxu0 0.0
    %117 = vmatpush2.msra.mxu0 0.0
    %118 = vmatprep.subr.mxu0 0.0
    %119 = vmatpush2.msra.mxu0 0.0
    %120 = vmatprep.subr.mxu0 0.0
    %121 = vmatpush2.msra.mxu0 0.0
    %122 = vmatprep.subr.mxu0 0.0
    %123 = vmatpush2.msra.mxu0 0.0
    %124 = vmatprep.subr.mxu0 0.0
    %125 = vmatpush2.msra.mxu0 0.0
    %126 = vmatprep.subr.mxu0 0.0
    %127 = vmatpush2.msra.mxu0 0.0
    %128 = vmatprep.subr.mxu0 0.0
    %129 = vmatpush2.msra.mxu0 0.0
    %130 = vmatprep.subr.mxu0 0.0
    %131 = vmatpush2.msra.mxu0 0.0
    %132 = vmatprep.subr.mxu0 0.0
    %133 = vmatpush2.msra.mxu0 0.0
    %134 = vmatprep.subr.mxu0 0.0
    %135 = vmatpush2.msra.mxu0 0.0
    %136 = vmatprep.subr.mxu0 0.0
    %137 = vmatpush2.msra.mxu0 0.0
    %138 = vmatprep.subr.mxu0 0.0
    %139 = vmatpush2.msra.mxu0 0.0
    %140 = vmatprep.mubr.f32.mxu0 0.0
    %141 = vmatmul.mubr.f32.gmra.mxu0 %v59
    %v142 = vpop.f32.mrf.mxu0
    %v143 = vadd.f32 0.0, %v142
    %v144 = vpop.f32.mrf.mxu0
    %145 = vdwg.mxu0
    %146 = vst [vmem:[#allocation2] sm:$0xff] %v143
    %v147 = vld [vmem:[#allocation2] sm:$0xff]
    %s148 = scalar_lea.vmem [#allocation3], 8
    %v149 = vld [vmem:[%s148] sm:$0xff]
    %v150 = vsub.f32 %v147, %v149
    %s151 = scalar_lea.vmem [#allocation8], 8
    %152 = vst [vmem:[%s151] sm:$0xff] %v150
    %v153 = vsel %vm53, %v149, %v147
    %v154 = vtanh.pop %v153
    %v155 = vld [vmem:[#allocation6] sm:$0xff]
    %v156 = vld [vmem:[#allocation6 + $0x8] sm:$0xff]
    %v157 = vld [vmem:[#allocation6 + $0x10] sm:$0xff]
    %v158 = vld [vmem:[#allocation6 + $0x18] sm:$0xff]
    %v159 = vld [vmem:[#allocation6 + $0x20] sm:$0xff]
    %v160 = vld [vmem:[#allocation6 + $0x28] sm:$0xff]
    %v161 = vld [vmem:[#allocation6 + $0x30] sm:$0xff]
    %v162 = vld [vmem:[#allocation6 + $0x38] sm:$0xff]
    %v163 = vld [vmem:[#allocation6 + $0x40] sm:$0xff]
    %v164 = vld [vmem:[#allocation6 + $0x48] sm:$0xff]
    %v165 = vld [vmem:[#allocation6 + $0x50] sm:$0xff]
    %v166 = vld [vmem:[#allocation6 + $0x58] sm:$0xff]
    %v167 = vld [vmem:[#allocation6 + $0x60] sm:$0xff]
    %v168 = vld [vmem:[#allocation6 + $0x68] sm:$0xff]
    %v169 = vld [vmem:[#allocation6 + $0x70] sm:$0xff]
    %v170 = vld [vmem:[#allocation6 + $0x78] sm:$0xff]
    %171 = vmatprep.subr.mxu0 0.0
    %172 = vmatpush1.msra.mxu0 %v170
    %173 = vmatprep.subr.mxu0 0.0
    %174 = vmatpush1.msra.mxu0 %v169
    %175 = vmatprep.subr.mxu0 0.0
    %176 = vmatpush1.msra.mxu0 %v168
    %177 = vmatprep.subr.mxu0 0.0
    %178 = vmatpush1.msra.mxu0 %v167
    %179 = vmatprep.subr.mxu0 0.0
    %180 = vmatpush1.msra.mxu0 %v166
    %181 = vmatprep.subr.mxu0 0.0
    %182 = vmatpush1.msra.mxu0 %v165
    %183 = vmatprep.subr.mxu0 0.0
    %184 = vmatpush1.msra.mxu0 %v164
    %185 = vmatprep.subr.mxu0 0.0
    %186 = vmatpush1.msra.mxu0 %v163
    %187 = vmatprep.subr.mxu0 0.0
    %188 = vmatpush1.msra.mxu0 %v162
    %189 = vmatprep.subr.mxu0 0.0
    %190 = vmatpush1.msra.mxu0 %v161
    %191 = vmatprep.subr.mxu0 0.0
    %192 = vmatpush1.msra.mxu0 %v160
    %193 = vmatprep.subr.mxu0 0.0
    %194 = vmatpush1.msra.mxu0 %v159
    %195 = vmatprep.subr.mxu0 0.0
    %196 = vmatpush1.msra.mxu0 %v158
    %197 = vmatprep.subr.mxu0 0.0
    %198 = vmatpush1.msra.mxu0 %v157
    %199 = vmatprep.subr.mxu0 0.0
    %200 = vmatpush1.msra.mxu0 %v156
    %201 = vmatprep.subr.mxu0 0.0
    %202 = vmatpush1.msra.mxu0 %v155
    %203 = vmatprep.subr.mxu0 0.0
    %204 = vmatpush2.msra.mxu0 0.0
    %205 = vmatprep.subr.mxu0 0.0
    %206 = vmatpush2.msra.mxu0 0.0
    %207 = vmatprep.subr.mxu0 0.0
    %208 = vmatpush2.msra.mxu0 0.0
    %209 = vmatprep.subr.mxu0 0.0
    %210 = vmatpush2.msra.mxu0 0.0
    %211 = vmatprep.subr.mxu0 0.0
    %212 = vmatpush2.msra.mxu0 0.0
    %213 = vmatprep.subr.mxu0 0.0
    %214 = vmatpush2.msra.mxu0 0.0
    %215 = vmatprep.subr.mxu0 0.0
    %216 = vmatpush2.msra.mxu0 0.0
    %217 = vmatprep.subr.mxu0 0.0
    %218 = vmatpush2.msra.mxu0 0.0
    %219 = vmatprep.subr.mxu0 0.0
    %220 = vmatpush2.msra.mxu0 0.0
    %221 = vmatprep.subr.mxu0 0.0
    %222 = vmatpush2.msra.mxu0 0.0
    %223 = vmatprep.subr.mxu0 0.0
    %224 = vmatpush2.msra.mxu0 0.0
    %225 = vmatprep.subr.mxu0 0.0
    %226 = vmatpush2.msra.mxu0 0.0
    %227 = vmatprep.subr.mxu0 0.0
    %228 = vmatpush2.msra.mxu0 0.0
    %229 = vmatprep.subr.mxu0 0.0
    %230 = vmatpush2.msra.mxu0 0.0
    %231 = vmatprep.subr.mxu0 0.0
    %232 = vmatpush2.msra.mxu0 0.0
    %233 = vmatprep.subr.mxu0 0.0
    %234 = vmatpush2.msra.mxu0 0.0
    %235 = vmatprep.mubr.f32.mxu0 0.0
    %236 = vmatmul.mubr.f32.gmra.mxu0 %v154
    %v237 = vpop.f32.mrf.mxu0
    %v238 = vadd.f32 0.0, %v237
    %v239 = vpop.f32.mrf.mxu0
    %240 = vdwg.mxu0
    %241 = vst [vmem:[#allocation2] sm:$0xff] %v238
    %v242 = vld [vmem:[#allocation2] sm:$0xff]
    %s243 = scalar_lea.vmem [#allocation3], 16
    %v244 = vld [vmem:[%s243] sm:$0xff]
    %v245 = vsub.f32 %v242, %v244
    %s246 = scalar_lea.vmem [#allocation8], 16
    %247 = vst [vmem:[%s246] sm:$0xff] %v245
    %v248 = vsel %vm53, %v244, %v242
    %v249 = vtanh.pop %v248
    %v250 = vld [vmem:[#allocation6] sm:$0xff]
    %v251 = vld [vmem:[#allocation6 + $0x8] sm:$0xff]
    %v252 = vld [vmem:[#allocation6 + $0x10] sm:$0xff]
    %v253 = vld [vmem:[#allocation6 + $0x18] sm:$0xff]
    %v254 = vld [vmem:[#allocation6 + $0x20] sm:$0xff]
    %v255 = vld [vmem:[#allocation6 + $0x28] sm:$0xff]
    %v256 = vld [vmem:[#allocation6 + $0x30] sm:$0xff]
    %v257 = vld [vmem:[#allocation6 + $0x38] sm:$0xff]
    %v258 = vld [vmem:[#allocation6 + $0x40] sm:$0xff]
    %v259 = vld [vmem:[#allocation6 + $0x48] sm:$0xff]
    %v260 = vld [vmem:[#allocation6 + $0x50] sm:$0xff]
    %v261 = vld [vmem:[#allocation6 + $0x58] sm:$0xff]
    %v262 = vld [vmem:[#allocation6 + $0x60] sm:$0xff]
    %v263 = vld [vmem:[#allocation6 + $0x68] sm:$0xff]
    %v264 = vld [vmem:[#allocation6 + $0x70] sm:$0xff]
    %v265 = vld [vmem:[#allocation6 + $0x78] sm:$0xff]
    %266 = vmatprep.subr.mxu0 0.0
    %267 = vmatpush1.msra.mxu0 %v265
    %268 = vmatprep.subr.mxu0 0.0
    %269 = vmatpush1.msra.mxu0 %v264
    %270 = vmatprep.subr.mxu0 0.0
    %271 = vmatpush1.msra.mxu0 %v263
    %272 = vmatprep.subr.mxu0 0.0
    %273 = vmatpush1.msra.mxu0 %v262
    %274 = vmatprep.subr.mxu0 0.0
    %275 = vmatpush1.msra.mxu0 %v261
    %276 = vmatprep.subr.mxu0 0.0
    %277 = vmatpush1.msra.mxu0 %v260
    %278 = vmatprep.subr.mxu0 0.0
    %279 = vmatpush1.msra.mxu0 %v259
    %280 = vmatprep.subr.mxu0 0.0
    %281 = vmatpush1.msra.mxu0 %v258
    %282 = vmatprep.subr.mxu0 0.0
    %283 = vmatpush1.msra.mxu0 %v257
    %284 = vmatprep.subr.mxu0 0.0
    %285 = vmatpush1.msra.mxu0 %v256
    %286 = vmatprep.subr.mxu0 0.0
    %287 = vmatpush1.msra.mxu0 %v255
    %288 = vmatprep.subr.mxu0 0.0
    %289 = vmatpush1.msra.mxu0 %v254
    %290 = vmatprep.subr.mxu0 0.0
    %291 = vmatpush1.msra.mxu0 %v253
    %292 = vmatprep.subr.mxu0 0.0
    %293 = vmatpush1.msra.mxu0 %v252
    %294 = vmatprep.subr.mxu0 0.0
    %295 = vmatpush1.msra.mxu0 %v251
    %296 = vmatprep.subr.mxu0 0.0
    %297 = vmatpush1.msra.mxu0 %v250
    %298 = vmatprep.subr.mxu0 0.0
    %299 = vmatpush2.msra.mxu0 0.0
    %300 = vmatprep.subr.mxu0 0.0
    %301 = vmatpush2.msra.mxu0 0.0
    %302 = vmatprep.subr.mxu0 0.0
    %303 = vmatpush2.msra.mxu0 0.0
    %304 = vmatprep.subr.mxu0 0.0
    %305 = vmatpush2.msra.mxu0 0.0
    %306 = vmatprep.subr.mxu0 0.0
    %307 = vmatpush2.msra.mxu0 0.0
    %308 = vmatprep.subr.mxu0 0.0
    %309 = vmatpush2.msra.mxu0 0.0
    %310 = vmatprep.subr.mxu0 0.0
    %311 = vmatpush2.msra.mxu0 0.0
    %312 = vmatprep.subr.mxu0 0.0
    %313 = vmatpush2.msra.mxu0 0.0
    %314 = vmatprep.subr.mxu0 0.0
    %315 = vmatpush2.msra.mxu0 0.0
    %316 = vmatprep.subr.mxu0 0.0
    %317 = vmatpush2.msra.mxu0 0.0
    %318 = vmatprep.subr.mxu0 0.0
    %319 = vmatpush2.msra.mxu0 0.0
    %320 = vmatprep.subr.mxu0 0.0
    %321 = vmatpush2.msra.mxu0 0.0
    %322 = vmatprep.subr.mxu0 0.0
    %323 = vmatpush2.msra.mxu0 0.0
    %324 = vmatprep.subr.mxu0 0.0
    %325 = vmatpush2.msra.mxu0 0.0
    %326 = vmatprep.subr.mxu0 0.0
    %327 = vmatpush2.msra.mxu0 0.0
    %328 = vmatprep.subr.mxu0 0.0
    %329 = vmatpush2.msra.mxu0 0.0
    %330 = vmatprep.mubr.f32.mxu0 0.0
    %331 = vmatmul.mubr.f32.gmra.mxu0 %v249
    %v332 = vpop.f32.mrf.mxu0
    %v333 = vadd.f32 0.0, %v332
    %v334 = vpop.f32.mrf.mxu0
    %335 = vdwg.mxu0
    %336 = vst [vmem:[#allocation2] sm:$0xff] %v333
    %v337 = vld [vmem:[#allocation2] sm:$0xff]
    %s338 = scalar_lea.vmem [#allocation3], 24
    %v339 = vld [vmem:[%s338] sm:$0xff]
    %v340 = vsub.f32 %v337, %v339
    %s341 = scalar_lea.vmem [#allocation8], 24
    %342 = vst [vmem:[%s341] sm:$0xff] %v340
    %v343 = vsel %vm53, %v339, %v337
    %v344 = vtanh.pop %v343
    %v345 = vld [vmem:[#allocation6] sm:$0xff]
    %v346 = vld [vmem:[#allocation6 + $0x8] sm:$0xff]
    %v347 = vld [vmem:[#allocation6 + $0x10] sm:$0xff]
    %v348 = vld [vmem:[#allocation6 + $0x18] sm:$0xff]
    %v349 = vld [vmem:[#allocation6 + $0x20] sm:$0xff]
    %v350 = vld [vmem:[#allocation6 + $0x28] sm:$0xff]
    %v351 = vld [vmem:[#allocation6 + $0x30] sm:$0xff]
    %v352 = vld [vmem:[#allocation6 + $0x38] sm:$0xff]
    %v353 = vld [vmem:[#allocation6 + $0x40] sm:$0xff]
    %v354 = vld [vmem:[#allocation6 + $0x48] sm:$0xff]
    %v355 = vld [vmem:[#allocation6 + $0x50] sm:$0xff]
    %v356 = vld [vmem:[#allocation6 + $0x58] sm:$0xff]
    %v357 = vld [vmem:[#allocation6 + $0x60] sm:$0xff]
    %v358 = vld [vmem:[#allocation6 + $0x68] sm:$0xff]
    %v359 = vld [vmem:[#allocation6 + $0x70] sm:$0xff]
    %v360 = vld [vmem:[#allocation6 + $0x78] sm:$0xff]
    %361 = vmatprep.subr.mxu0 0.0
    %362 = vmatpush1.msra.mxu0 %v360
    %363 = vmatprep.subr.mxu0 0.0
    %364 = vmatpush1.msra.mxu0 %v359
    %365 = vmatprep.subr.mxu0 0.0
    %366 = vmatpush1.msra.mxu0 %v358
    %367 = vmatprep.subr.mxu0 0.0
    %368 = vmatpush1.msra.mxu0 %v357
    %369 = vmatprep.subr.mxu0 0.0
    %370 = vmatpush1.msra.mxu0 %v356
    %371 = vmatprep.subr.mxu0 0.0
    %372 = vmatpush1.msra.mxu0 %v355
    %373 = vmatprep.subr.mxu0 0.0
    %374 = vmatpush1.msra.mxu0 %v354
    %375 = vmatprep.subr.mxu0 0.0
    %376 = vmatpush1.msra.mxu0 %v353
    %377 = vmatprep.subr.mxu0 0.0
    %378 = vmatpush1.msra.mxu0 %v352
    %379 = vmatprep.subr.mxu0 0.0
    %380 = vmatpush1.msra.mxu0 %v351
    %381 = vmatprep.subr.mxu0 0.0
    %382 = vmatpush1.msra.mxu0 %v350
    %383 = vmatprep.subr.mxu0 0.0
    %384 = vmatpush1.msra.mxu0 %v349
    %385 = vmatprep.subr.mxu0 0.0
    %386 = vmatpush1.msra.mxu0 %v348
    %387 = vmatprep.subr.mxu0 0.0
    %388 = vmatpush1.msra.mxu0 %v347
    %389 = vmatprep.subr.mxu0 0.0
    %390 = vmatpush1.msra.mxu0 %v346
    %391 = vmatprep.subr.mxu0 0.0
    %392 = vmatpush1.msra.mxu0 %v345
    %393 = vmatprep.subr.mxu0 0.0
    %394 = vmatpush2.msra.mxu0 0.0
    %395 = vmatprep.subr.mxu0 0.0
    %396 = vmatpush2.msra.mxu0 0.0
    %397 = vmatprep.subr.mxu0 0.0
    %398 = vmatpush2.msra.mxu0 0.0
    %399 = vmatprep.subr.mxu0 0.0
    %400 = vmatpush2.msra.mxu0 0.0
    %401 = vmatprep.subr.mxu0 0.0
    %402 = vmatpush2.msra.mxu0 0.0
    %403 = vmatprep.subr.mxu0 0.0
    %404 = vmatpush2.msra.mxu0 0.0
    %405 = vmatprep.subr.mxu0 0.0
    %406 = vmatpush2.msra.mxu0 0.0
    %407 = vmatprep.subr.mxu0 0.0
    %408 = vmatpush2.msra.mxu0 0.0
    %409 = vmatprep.subr.mxu0 0.0
    %410 = vmatpush2.msra.mxu0 0.0
    %411 = vmatprep.subr.mxu0 0.0
    %412 = vmatpush2.msra.mxu0 0.0
    %413 = vmatprep.subr.mxu0 0.0
    %414 = vmatpush2.msra.mxu0 0.0
    %415 = vmatprep.subr.mxu0 0.0
    %416 = vmatpush2.msra.mxu0 0.0
    %417 = vmatprep.subr.mxu0 0.0
    %418 = vmatpush2.msra.mxu0 0.0
    %419 = vmatprep.subr.mxu0 0.0
    %420 = vmatpush2.msra.mxu0 0.0
    %421 = vmatprep.subr.mxu0 0.0
    %422 = vmatpush2.msra.mxu0 0.0
    %423 = vmatprep.subr.mxu0 0.0
    %424 = vmatpush2.msra.mxu0 0.0
    %425 = vmatprep.mubr.f32.mxu0 0.0
    %426 = vmatmul.mubr.f32.gmra.mxu0 %v344
    %v427 = vpop.f32.mrf.mxu0
    %v428 = vadd.f32 0.0, %v427
    %v429 = vpop.f32.mrf.mxu0
    %430 = vdwg.mxu0
    %431 = vst [vmem:[#allocation2] sm:$0xff] %v428
    %v432 = vld [vmem:[#allocation2] sm:$0xff]
    %s433 = scalar_lea.vmem [#allocation3], 32
    %v434 = vld [vmem:[%s433] sm:$0xff]
    %v435 = vsub.f32 %v432, %v434
    %s436 = scalar_lea.vmem [#allocation8], 32
    %437 = vst [vmem:[%s436] sm:$0xff] %v435
    %v438 = vsel %vm53, %v434, %v432
    %v439 = vtanh.pop %v438
    %v440 = vld [vmem:[#allocation6] sm:$0xff]
    %v441 = vld [vmem:[#allocation6 + $0x8] sm:$0xff]
    %v442 = vld [vmem:[#allocation6 + $0x10] sm:$0xff]
    %v443 = vld [vmem:[#allocation6 + $0x18] sm:$0xff]
    %v444 = vld [vmem:[#allocation6 + $0x20] sm:$0xff]
    %v445 = vld [vmem:[#allocation6 + $0x28] sm:$0xff]
    %v446 = vld [vmem:[#allocation6 + $0x30] sm:$0xff]
    %v447 = vld [vmem:[#allocation6 + $0x38] sm:$0xff]
    %v448 = vld [vmem:[#allocation6 + $0x40] sm:$0xff]
    %v449 = vld [vmem:[#allocation6 + $0x48] sm:$0xff]
    %v450 = vld [vmem:[#allocation6 + $0x50] sm:$0xff]
    %v451 = vld [vmem:[#allocation6 + $0x58] sm:$0xff]
    %v452 = vld [vmem:[#allocation6 + $0x60] sm:$0xff]
    %v453 = vld [vmem:[#allocation6 + $0x68] sm:$0xff]
    %v454 = vld [vmem:[#allocation6 + $0x70] sm:$0xff]
    %v455 = vld [vmem:[#allocation6 + $0x78] sm:$0xff]
    %456 = vmatprep.subr.mxu0 0.0
    %457 = vmatpush1.msra.mxu0 %v455
    %458 = vmatprep.subr.mxu0 0.0
    %459 = vmatpush1.msra.mxu0 %v454
    %460 = vmatprep.subr.mxu0 0.0
    %461 = vmatpush1.msra.mxu0 %v453
    %462 = vmatprep.subr.mxu0 0.0
    %463 = vmatpush1.msra.mxu0 %v452
    %464 = vmatprep.subr.mxu0 0.0
    %465 = vmatpush1.msra.mxu0 %v451
    %466 = vmatprep.subr.mxu0 0.0
    %467 = vmatpush1.msra.mxu0 %v450
    %468 = vmatprep.subr.mxu0 0.0
    %469 = vmatpush1.msra.mxu0 %v449
    %470 = vmatprep.subr.mxu0 0.0
    %471 = vmatpush1.msra.mxu0 %v448
    %472 = vmatprep.subr.mxu0 0.0
    %473 = vmatpush1.msra.mxu0 %v447
    %474 = vmatprep.subr.mxu0 0.0
    %475 = vmatpush1.msra.mxu0 %v446
    %476 = vmatprep.subr.mxu0 0.0
    %477 = vmatpush1.msra.mxu0 %v445
    %478 = vmatprep.subr.mxu0 0.0
    %479 = vmatpush1.msra.mxu0 %v444
    %480 = vmatprep.subr.mxu0 0.0
    %481 = vmatpush1.msra.mxu0 %v443
    %482 = vmatprep.subr.mxu0 0.0
    %483 = vmatpush1.msra.mxu0 %v442
    %484 = vmatprep.subr.mxu0 0.0
    %485 = vmatpush1.msra.mxu0 %v441
    %486 = vmatprep.subr.mxu0 0.0
    %487 = vmatpush1.msra.mxu0 %v440
    %488 = vmatprep.subr.mxu0 0.0
    %489 = vmatpush2.msra.mxu0 0.0
    %490 = vmatprep.subr.mxu0 0.0
    %491 = vmatpush2.msra.mxu0 0.0
    %492 = vmatprep.subr.mxu0 0.0
    %493 = vmatpush2.msra.mxu0 0.0
    %494 = vmatprep.subr.mxu0 0.0
    %495 = vmatpush2.msra.mxu0 0.0
    %496 = vmatprep.subr.mxu0 0.0
    %497 = vmatpush2.msra.mxu0 0.0
    %498 = vmatprep.subr.mxu0 0.0
    %499 = vmatpush2.msra.mxu0 0.0
    %500 = vmatprep.subr.mxu0 0.0
    %501 = vmatpush2.msra.mxu0 0.0
    %502 = vmatprep.subr.mxu0 0.0
    %503 = vmatpush2.msra.mxu0 0.0
    %504 = vmatprep.subr.mxu0 0.0
    %505 = vmatpush2.msra.mxu0 0.0
    %506 = vmatprep.subr.mxu0 0.0
    %507 = vmatpush2.msra.mxu0 0.0
    %508 = vmatprep.subr.mxu0 0.0
    %509 = vmatpush2.msra.mxu0 0.0
    %510 = vmatprep.subr.mxu0 0.0
    %511 = vmatpush2.msra.mxu0 0.0
    %512 = vmatprep.subr.mxu0 0.0
    %513 = vmatpush2.msra.mxu0 0.0
    %514 = vmatprep.subr.mxu0 0.0
    %515 = vmatpush2.msra.mxu0 0.0
    %516 = vmatprep.subr.mxu0 0.0
    %517 = vmatpush2.msra.mxu0 0.0
    %518 = vmatprep.subr.mxu0 0.0
    %519 = vmatpush2.msra.mxu0 0.0
    %520 = vmatprep.mubr.f32.mxu0 0.0
    %521 = vmatmul.mubr.f32.gmra.mxu0 %v439
    %v522 = vpop.f32.mrf.mxu0
    %v523 = vadd.f32 0.0, %v522
    %v524 = vpop.f32.mrf.mxu0
    %525 = vdwg.mxu0
    %526 = vst [vmem:[#allocation2] sm:$0xff] %v523
    %v527 = vld [vmem:[#allocation2] sm:$0xff]
    %s528 = scalar_lea.vmem [#allocation3], 40
    %v529 = vld [vmem:[%s528] sm:$0xff]
    %v530 = vsub.f32 %v527, %v529
    %s531 = scalar_lea.vmem [#allocation8], 40
    %532 = vst [vmem:[%s531] sm:$0xff] %v530
    %v533 = vsel %vm53, %v529, %v527
    %v534 = vtanh.pop %v533
    %v535 = vld [vmem:[#allocation6] sm:$0xff]
    %v536 = vld [vmem:[#allocation6 + $0x8] sm:$0xff]
    %v537 = vld [vmem:[#allocation6 + $0x10] sm:$0xff]
    %v538 = vld [vmem:[#allocation6 + $0x18] sm:$0xff]
    %v539 = vld [vmem:[#allocation6 + $0x20] sm:$0xff]
    %v540 = vld [vmem:[#allocation6 + $0x28] sm:$0xff]
    %v541 = vld [vmem:[#allocation6 + $0x30] sm:$0xff]
    %v542 = vld [vmem:[#allocation6 + $0x38] sm:$0xff]
    %v543 = vld [vmem:[#allocation6 + $0x40] sm:$0xff]
    %v544 = vld [vmem:[#allocation6 + $0x48] sm:$0xff]
    %v545 = vld [vmem:[#allocation6 + $0x50] sm:$0xff]
    %v546 = vld [vmem:[#allocation6 + $0x58] sm:$0xff]
    %v547 = vld [vmem:[#allocation6 + $0x60] sm:$0xff]
    %v548 = vld [vmem:[#allocation6 + $0x68] sm:$0xff]
    %v549 = vld [vmem:[#allocation6 + $0x70] sm:$0xff]
    %v550 = vld [vmem:[#allocation6 + $0x78] sm:$0xff]
    %551 = vmatprep.subr.mxu0 0.0
    %552 = vmatpush1.msra.mxu0 %v550
    %553 = vmatprep.subr.mxu0 0.0
    %554 = vmatpush1.msra.mxu0 %v549
    %555 = vmatprep.subr.mxu0 0.0
    %556 = vmatpush1.msra.mxu0 %v548
    %557 = vmatprep.subr.mxu0 0.0
    %558 = vmatpush1.msra.mxu0 %v547
    %559 = vmatprep.subr.mxu0 0.0
    %560 = vmatpush1.msra.mxu0 %v546
    %561 = vmatprep.subr.mxu0 0.0
    %562 = vmatpush1.msra.mxu0 %v545
    %563 = vmatprep.subr.mxu0 0.0
    %564 = vmatpush1.msra.mxu0 %v544
    %565 = vmatprep.subr.mxu0 0.0
    %566 = vmatpush1.msra.mxu0 %v543
    %567 = vmatprep.subr.mxu0 0.0
    %568 = vmatpush1.msra.mxu0 %v542
    %569 = vmatprep.subr.mxu0 0.0
    %570 = vmatpush1.msra.mxu0 %v541
    %571 = vmatprep.subr.mxu0 0.0
    %572 = vmatpush1.msra.mxu0 %v540
    %573 = vmatprep.subr.mxu0 0.0
    %574 = vmatpush1.msra.mxu0 %v539
    %575 = vmatprep.subr.mxu0 0.0
    %576 = vmatpush1.msra.mxu0 %v538
    %577 = vmatprep.subr.mxu0 0.0
    %578 = vmatpush1.msra.mxu0 %v537
    %579 = vmatprep.subr.mxu0 0.0
    %580 = vmatpush1.msra.mxu0 %v536
    %581 = vmatprep.subr.mxu0 0.0
    %582 = vmatpush1.msra.mxu0 %v535
    %583 = vmatprep.subr.mxu0 0.0
    %584 = vmatpush2.msra.mxu0 0.0
    %585 = vmatprep.subr.mxu0 0.0
    %586 = vmatpush2.msra.mxu0 0.0
    %587 = vmatprep.subr.mxu0 0.0
    %588 = vmatpush2.msra.mxu0 0.0
    %589 = vmatprep.subr.mxu0 0.0
    %590 = vmatpush2.msra.mxu0 0.0
    %591 = vmatprep.subr.mxu0 0.0
    %592 = vmatpush2.msra.mxu0 0.0
    %593 = vmatprep.subr.mxu0 0.0
    %594 = vmatpush2.msra.mxu0 0.0
    %595 = vmatprep.subr.mxu0 0.0
    %596 = vmatpush2.msra.mxu0 0.0
    %597 = vmatprep.subr.mxu0 0.0
    %598 = vmatpush2.msra.mxu0 0.0
    %599 = vmatprep.subr.mxu0 0.0
    %600 = vmatpush2.msra.mxu0 0.0
    %601 = vmatprep.subr.mxu0 0.0
    %602 = vmatpush2.msra.mxu0 0.0
    %603 = vmatprep.subr.mxu0 0.0
    %604 = vmatpush2.msra.mxu0 0.0
    %605 = vmatprep.subr.mxu0 0.0
    %606 = vmatpush2.msra.mxu0 0.0
    %607 = vmatprep.subr.mxu0 0.0
    %608 = vmatpush2.msra.mxu0 0.0
    %609 = vmatprep.subr.mxu0 0.0
    %610 = vmatpush2.msra.mxu0 0.0
    %611 = vmatprep.subr.mxu0 0.0
    %612 = vmatpush2.msra.mxu0 0.0
    %613 = vmatprep.subr.mxu0 0.0
    %614 = vmatpush2.msra.mxu0 0.0
    %615 = vmatprep.mubr.f32.mxu0 0.0
    %616 = vmatmul.mubr.f32.gmra.mxu0 %v534
    %v617 = vpop.f32.mrf.mxu0
    %v618 = vadd.f32 0.0, %v617
    %v619 = vpop.f32.mrf.mxu0
    %620 = vdwg.mxu0
    %621 = vst [vmem:[#allocation2] sm:$0xff] %v618
    %v622 = vld [vmem:[#allocation2] sm:$0xff]
    %s623 = scalar_lea.vmem [#allocation3], 48
    %v624 = vld [vmem:[%s623] sm:$0xff]
    %v625 = vsub.f32 %v622, %v624
    %s626 = scalar_lea.vmem [#allocation8], 48
    %627 = vst [vmem:[%s626] sm:$0xff] %v625
    %v628 = vsel %vm53, %v624, %v622
    %v629 = vtanh.pop %v628
    %v630 = vld [vmem:[#allocation6] sm:$0xff]
    %v631 = vld [vmem:[#allocation6 + $0x8] sm:$0xff]
    %v632 = vld [vmem:[#allocation6 + $0x10] sm:$0xff]
    %v633 = vld [vmem:[#allocation6 + $0x18] sm:$0xff]
    %v634 = vld [vmem:[#allocation6 + $0x20] sm:$0xff]
    %v635 = vld [vmem:[#allocation6 + $0x28] sm:$0xff]
    %v636 = vld [vmem:[#allocation6 + $0x30] sm:$0xff]
    %v637 = vld [vmem:[#allocation6 + $0x38] sm:$0xff]
    %v638 = vld [vmem:[#allocation6 + $0x40] sm:$0xff]
    %v639 = vld [vmem:[#allocation6 + $0x48] sm:$0xff]
    %v640 = vld [vmem:[#allocation6 + $0x50] sm:$0xff]
    %v641 = vld [vmem:[#allocation6 + $0x58] sm:$0xff]
    %v642 = vld [vmem:[#allocation6 + $0x60] sm:$0xff]
    %v643 = vld [vmem:[#allocation6 + $0x68] sm:$0xff]
    %v644 = vld [vmem:[#allocation6 + $0x70] sm:$0xff]
    %v645 = vld [vmem:[#allocation6 + $0x78] sm:$0xff]
    %646 = vmatprep.subr.mxu0 0.0
    %647 = vmatpush1.msra.mxu0 %v645
    %648 = vmatprep.subr.mxu0 0.0
    %649 = vmatpush1.msra.mxu0 %v644
    %650 = vmatprep.subr.mxu0 0.0
    %651 = vmatpush1.msra.mxu0 %v643
    %652 = vmatprep.subr.mxu0 0.0
    %653 = vmatpush1.msra.mxu0 %v642
    %654 = vmatprep.subr.mxu0 0.0
    %655 = vmatpush1.msra.mxu0 %v641
    %656 = vmatprep.subr.mxu0 0.0
    %657 = vmatpush1.msra.mxu0 %v640
    %658 = vmatprep.subr.mxu0 0.0
    %659 = vmatpush1.msra.mxu0 %v639
    %660 = vmatprep.subr.mxu0 0.0
    %661 = vmatpush1.msra.mxu0 %v638
    %662 = vmatprep.subr.mxu0 0.0
    %663 = vmatpush1.msra.mxu0 %v637
    %664 = vmatprep.subr.mxu0 0.0
    %665 = vmatpush1.msra.mxu0 %v636
    %666 = vmatprep.subr.mxu0 0.0
    %667 = vmatpush1.msra.mxu0 %v635
    %668 = vmatprep.subr.mxu0 0.0
    %669 = vmatpush1.msra.mxu0 %v634
    %670 = vmatprep.subr.mxu0 0.0
    %671 = vmatpush1.msra.mxu0 %v633
    %672 = vmatprep.subr.mxu0 0.0
    %673 = vmatpush1.msra.mxu0 %v632
    %674 = vmatprep.subr.mxu0 0.0
    %675 = vmatpush1.msra.mxu0 %v631
    %676 = vmatprep.subr.mxu0 0.0
    %677 = vmatpush1.msra.mxu0 %v630
    %678 = vmatprep.subr.mxu0 0.0
    %679 = vmatpush2.msra.mxu0 0.0
    %680 = vmatprep.subr.mxu0 0.0
    %681 = vmatpush2.msra.mxu0 0.0
    %682 = vmatprep.subr.mxu0 0.0
    %683 = vmatpush2.msra.mxu0 0.0
    %684 = vmatprep.subr.mxu0 0.0
    %685 = vmatpush2.msra.mxu0 0.0
    %686 = vmatprep.subr.mxu0 0.0
    %687 = vmatpush2.msra.mxu0 0.0
    %688 = vmatprep.subr.mxu0 0.0
    %689 = vmatpush2.msra.mxu0 0.0
    %690 = vmatprep.subr.mxu0 0.0
    %691 = vmatpush2.msra.mxu0 0.0
    %692 = vmatprep.subr.mxu0 0.0
    %693 = vmatpush2.msra.mxu0 0.0
    %694 = vmatprep.subr.mxu0 0.0
    %695 = vmatpush2.msra.mxu0 0.0
    %696 = vmatprep.subr.mxu0 0.0
    %697 = vmatpush2.msra.mxu0 0.0
    %698 = vmatprep.subr.mxu0 0.0
    %699 = vmatpush2.msra.mxu0 0.0
    %700 = vmatprep.subr.mxu0 0.0
    %701 = vmatpush2.msra.mxu0 0.0
    %702 = vmatprep.subr.mxu0 0.0
    %703 = vmatpush2.msra.mxu0 0.0
    %704 = vmatprep.subr.mxu0 0.0
    %705 = vmatpush2.msra.mxu0 0.0
    %706 = vmatprep.subr.mxu0 0.0
    %707 = vmatpush2.msra.mxu0 0.0
    %708 = vmatprep.subr.mxu0 0.0
    %709 = vmatpush2.msra.mxu0 0.0
    %710 = vmatprep.mubr.f32.mxu0 0.0
    %711 = vmatmul.mubr.f32.gmra.mxu0 %v629
    %v712 = vpop.f32.mrf.mxu0
    %v713 = vadd.f32 0.0, %v712
    %v714 = vpop.f32.mrf.mxu0
    %715 = vdwg.mxu0
    %716 = vst [vmem:[#allocation2] sm:$0xff] %v713
    %v717 = vld [vmem:[#allocation2] sm:$0xff]
    %s718 = scalar_lea.vmem [#allocation3], 56
    %v719 = vld [vmem:[%s718] sm:$0xff]
    %v720 = vsub.f32 %v717, %v719
    %s721 = scalar_lea.vmem [#allocation8], 56
    %722 = vst [vmem:[%s721] sm:$0xff] %v720
    %v723 = vsel %vm53, %v719, %v717
    %v724 = vtanh.pop %v723
    %v725 = vld [vmem:[#allocation6] sm:$0xff]
    %v726 = vld [vmem:[#allocation6 + $0x8] sm:$0xff]
    %v727 = vld [vmem:[#allocation6 + $0x10] sm:$0xff]
    %v728 = vld [vmem:[#allocation6 + $0x18] sm:$0xff]
    %v729 = vld [vmem:[#allocation6 + $0x20] sm:$0xff]
    %v730 = vld [vmem:[#allocation6 + $0x28] sm:$0xff]
    %v731 = vld [vmem:[#allocation6 + $0x30] sm:$0xff]
    %v732 = vld [vmem:[#allocation6 + $0x38] sm:$0xff]
    %v733 = vld [vmem:[#allocation6 + $0x40] sm:$0xff]
    %v734 = vld [vmem:[#allocation6 + $0x48] sm:$0xff]
    %v735 = vld [vmem:[#allocation6 + $0x50] sm:$0xff]
    %v736 = vld [vmem:[#allocation6 + $0x58] sm:$0xff]
    %v737 = vld [vmem:[#allocation6 + $0x60] sm:$0xff]
    %v738 = vld [vmem:[#allocation6 + $0x68] sm:$0xff]
    %v739 = vld [vmem:[#allocation6 + $0x70] sm:$0xff]
    %v740 = vld [vmem:[#allocation6 + $0x78] sm:$0xff]
    %741 = vmatprep.subr.mxu0 0.0
    %742 = vmatpush1.msra.mxu0 %v740
    %743 = vmatprep.subr.mxu0 0.0
    %744 = vmatpush1.msra.mxu0 %v739
    %745 = vmatprep.subr.mxu0 0.0
    %746 = vmatpush1.msra.mxu0 %v738
    %747 = vmatprep.subr.mxu0 0.0
    %748 = vmatpush1.msra.mxu0 %v737
    %749 = vmatprep.subr.mxu0 0.0
    %750 = vmatpush1.msra.mxu0 %v736
    %751 = vmatprep.subr.mxu0 0.0
    %752 = vmatpush1.msra.mxu0 %v735
    %753 = vmatprep.subr.mxu0 0.0
    %754 = vmatpush1.msra.mxu0 %v734
    %755 = vmatprep.subr.mxu0 0.0
    %756 = vmatpush1.msra.mxu0 %v733
    %757 = vmatprep.subr.mxu0 0.0
    %758 = vmatpush1.msra.mxu0 %v732
    %759 = vmatprep.subr.mxu0 0.0
    %760 = vmatpush1.msra.mxu0 %v731
    %761 = vmatprep.subr.mxu0 0.0
    %762 = vmatpush1.msra.mxu0 %v730
    %763 = vmatprep.subr.mxu0 0.0
    %764 = vmatpush1.msra.mxu0 %v729
    %765 = vmatprep.subr.mxu0 0.0
    %766 = vmatpush1.msra.mxu0 %v728
    %767 = vmatprep.subr.mxu0 0.0
    %768 = vmatpush1.msra.mxu0 %v727
    %769 = vmatprep.subr.mxu0 0.0
    %770 = vmatpush1.msra.mxu0 %v726
    %771 = vmatprep.subr.mxu0 0.0
    %772 = vmatpush1.msra.mxu0 %v725
    %773 = vmatprep.subr.mxu0 0.0
    %774 = vmatpush2.msra.mxu0 0.0
    %775 = vmatprep.subr.mxu0 0.0
    %776 = vmatpush2.msra.mxu0 0.0
    %777 = vmatprep.subr.mxu0 0.0
    %778 = vmatpush2.msra.mxu0 0.0
    %779 = vmatprep.subr.mxu0 0.0
    %780 = vmatpush2.msra.mxu0 0.0
    %781 = vmatprep.subr.mxu0 0.0
    %782 = vmatpush2.msra.mxu0 0.0
    %783 = vmatprep.subr.mxu0 0.0
    %784 = vmatpush2.msra.mxu0 0.0
    %785 = vmatprep.subr.mxu0 0.0
    %786 = vmatpush2.msra.mxu0 0.0
    %787 = vmatprep.subr.mxu0 0.0
    %788 = vmatpush2.msra.mxu0 0.0
    %789 = vmatprep.subr.mxu0 0.0
    %790 = vmatpush2.msra.mxu0 0.0
    %791 = vmatprep.subr.mxu0 0.0
    %792 = vmatpush2.msra.mxu0 0.0
    %793 = vmatprep.subr.mxu0 0.0
    %794 = vmatpush2.msra.mxu0 0.0
    %795 = vmatprep.subr.mxu0 0.0
    %796 = vmatpush2.msra.mxu0 0.0
    %797 = vmatprep.subr.mxu0 0.0
    %798 = vmatpush2.msra.mxu0 0.0
    %799 = vmatprep.subr.mxu0 0.0
    %800 = vmatpush2.msra.mxu0 0.0
    %801 = vmatprep.subr.mxu0 0.0
    %802 = vmatpush2.msra.mxu0 0.0
    %803 = vmatprep.subr.mxu0 0.0
    %804 = vmatpush2.msra.mxu0 0.0
    %805 = vmatprep.mubr.f32.mxu0 0.0
    %806 = vmatmul.mubr.f32.gmra.mxu0 %v724
    %v807 = vpop.f32.mrf.mxu0
    %v808 = vadd.f32 0.0, %v807
    %v809 = vpop.f32.mrf.mxu0
    %810 = vdwg.mxu0
    %811 = vst [vmem:[#allocation2] sm:$0xff] %v808
    %v812 = vld [vmem:[#allocation2] sm:$0xff]
    %s813 = scalar_lea.vmem [#allocation8], 64
    %814 = vst [vmem:[%s813] sm:$0xff] %v812
    %v815 = vtanh.pop %v812
    %v816 = vld [vmem:[#allocation6] sm:$0xff]
    %v817 = vld [vmem:[#allocation6 + $0x8] sm:$0xff]
    %v818 = vld [vmem:[#allocation6 + $0x10] sm:$0xff]
    %v819 = vld [vmem:[#allocation6 + $0x18] sm:$0xff]
    %v820 = vld [vmem:[#allocation6 + $0x20] sm:$0xff]
    %v821 = vld [vmem:[#allocation6 + $0x28] sm:$0xff]
    %v822 = vld [vmem:[#allocation6 + $0x30] sm:$0xff]
    %v823 = vld [vmem:[#allocation6 + $0x38] sm:$0xff]
    %v824 = vld [vmem:[#allocation6 + $0x40] sm:$0xff]
    %v825 = vld [vmem:[#allocation6 + $0x48] sm:$0xff]
    %v826 = vld [vmem:[#allocation6 + $0x50] sm:$0xff]
    %v827 = vld [vmem:[#allocation6 + $0x58] sm:$0xff]
    %v828 = vld [vmem:[#allocation6 + $0x60] sm:$0xff]
    %v829 = vld [vmem:[#allocation6 + $0x68] sm:$0xff]
    %v830 = vld [vmem:[#allocation6 + $0x70] sm:$0xff]
    %v831 = vld [vmem:[#allocation6 + $0x78] sm:$0xff]
    %832 = vmatprep.subr.mxu0 0.0
    %833 = vmatpush1.msra.mxu0 %v831
    %834 = vmatprep.subr.mxu0 0.0
    %835 = vmatpush1.msra.mxu0 %v830
    %836 = vmatprep.subr.mxu0 0.0
    %837 = vmatpush1.msra.mxu0 %v829
    %838 = vmatprep.subr.mxu0 0.0
    %839 = vmatpush1.msra.mxu0 %v828
    %840 = vmatprep.subr.mxu0 0.0
    %841 = vmatpush1.msra.mxu0 %v827
    %842 = vmatprep.subr.mxu0 0.0
    %843 = vmatpush1.msra.mxu0 %v826
    %844 = vmatprep.subr.mxu0 0.0
    %845 = vmatpush1.msra.mxu0 %v825
    %846 = vmatprep.subr.mxu0 0.0
    %847 = vmatpush1.msra.mxu0 %v824
    %848 = vmatprep.subr.mxu0 0.0
    %849 = vmatpush1.msra.mxu0 %v823
    %850 = vmatprep.subr.mxu0 0.0
    %851 = vmatpush1.msra.mxu0 %v822
    %852 = vmatprep.subr.mxu0 0.0
    %853 = vmatpush1.msra.mxu0 %v821
    %854 = vmatprep.subr.mxu0 0.0
    %855 = vmatpush1.msra.mxu0 %v820
    %856 = vmatprep.subr.mxu0 0.0
    %857 = vmatpush1.msra.mxu0 %v819
    %858 = vmatprep.subr.mxu0 0.0
    %859 = vmatpush1.msra.mxu0 %v818
    %860 = vmatprep.subr.mxu0 0.0
    %861 = vmatpush1.msra.mxu0 %v817
    %862 = vmatprep.subr.mxu0 0.0
    %863 = vmatpush1.msra.mxu0 %v816
    %864 = vmatprep.subr.mxu0 0.0
    %865 = vmatpush2.msra.mxu0 0.0
    %866 = vmatprep.subr.mxu0 0.0
    %867 = vmatpush2.msra.mxu0 0.0
    %868 = vmatprep.subr.mxu0 0.0
    %869 = vmatpush2.msra.mxu0 0.0
    %870 = vmatprep.subr.mxu0 0.0
    %871 = vmatpush2.msra.mxu0 0.0
    %872 = vmatprep.subr.mxu0 0.0
    %873 = vmatpush2.msra.mxu0 0.0
    %874 = vmatprep.subr.mxu0 0.0
    %875 = vmatpush2.msra.mxu0 0.0
    %876 = vmatprep.subr.mxu0 0.0
    %877 = vmatpush2.msra.mxu0 0.0
    %878 = vmatprep.subr.mxu0 0.0
    %879 = vmatpush2.msra.mxu0 0.0
    %880 = vmatprep.subr.mxu0 0.0
    %881 = vmatpush2.msra.mxu0 0.0
    %882 = vmatprep.subr.mxu0 0.0
    %883 = vmatpush2.msra.mxu0 0.0
    %884 = vmatprep.subr.mxu0 0.0
    %885 = vmatpush2.msra.mxu0 0.0
    %886 = vmatprep.subr.mxu0 0.0
    %887 = vmatpush2.msra.mxu0 0.0
    %888 = vmatprep.subr.mxu0 0.0
    %889 = vmatpush2.msra.mxu0 0.0
    %890 = vmatprep.subr.mxu0 0.0
    %891 = vmatpush2.msra.mxu0 0.0
    %892 = vmatprep.subr.mxu0 0.0
    %893 = vmatpush2.msra.mxu0 0.0
    %894 = vmatprep.subr.mxu0 0.0
    %895 = vmatpush2.msra.mxu0 0.0
    %896 = vmatprep.mubr.f32.mxu0 0.0
    %897 = vmatmul.mubr.f32.gmra.mxu0 %v815
    %v898 = vpop.f32.mrf.mxu0
    %v899 = vadd.f32 0.0, %v898
    %v900 = vpop.f32.mrf.mxu0
    %901 = vdwg.mxu0
    %902 = vst [vmem:[#allocation2] sm:$0xff] %v899
    %v903 = vld [vmem:[#allocation2] sm:$0xff]
    %s904 = scalar_lea.vmem [#allocation8], 72
    %905 = vst [vmem:[%s904] sm:$0xff] %v903
    %v906 = vtanh.pop %v903
    %v907 = vld [vmem:[#allocation6] sm:$0xff]
    %v908 = vld [vmem:[#allocation6 + $0x8] sm:$0xff]
    %v909 = vld [vmem:[#allocation6 + $0x10] sm:$0xff]
    %v910 = vld [vmem:[#allocation6 + $0x18] sm:$0xff]
    %v911 = vld [vmem:[#allocation6 + $0x20] sm:$0xff]
    %v912 = vld [vmem:[#allocation6 + $0x28] sm:$0xff]
    %v913 = vld [vmem:[#allocation6 + $0x30] sm:$0xff]
    %v914 = vld [vmem:[#allocation6 + $0x38] sm:$0xff]
    %v915 = vld [vmem:[#allocation6 + $0x40] sm:$0xff]
    %v916 = vld [vmem:[#allocation6 + $0x48] sm:$0xff]
    %v917 = vld [vmem:[#allocation6 + $0x50] sm:$0xff]
    %v918 = vld [vmem:[#allocation6 + $0x58] sm:$0xff]
    %v919 = vld [vmem:[#allocation6 + $0x60] sm:$0xff]
    %v920 = vld [vmem:[#allocation6 + $0x68] sm:$0xff]
    %v921 = vld [vmem:[#allocation6 + $0x70] sm:$0xff]
    %v922 = vld [vmem:[#allocation6 + $0x78] sm:$0xff]
    %923 = vmatprep.subr.mxu0 0.0
    %924 = vmatpush1.msra.mxu0 %v922
    %925 = vmatprep.subr.mxu0 0.0
    %926 = vmatpush1.msra.mxu0 %v921
    %927 = vmatprep.subr.mxu0 0.0
    %928 = vmatpush1.msra.mxu0 %v920
    %929 = vmatprep.subr.mxu0 0.0
    %930 = vmatpush1.msra.mxu0 %v919
    %931 = vmatprep.subr.mxu0 0.0
    %932 = vmatpush1.msra.mxu0 %v918
    %933 = vmatprep.subr.mxu0 0.0
    %934 = vmatpush1.msra.mxu0 %v917
    %935 = vmatprep.subr.mxu0 0.0
    %936 = vmatpush1.msra.mxu0 %v916
    %937 = vmatprep.subr.mxu0 0.0
    %938 = vmatpush1.msra.mxu0 %v915
    %939 = vmatprep.subr.mxu0 0.0
    %940 = vmatpush1.msra.mxu0 %v914
    %941 = vmatprep.subr.mxu0 0.0
    %942 = vmatpush1.msra.mxu0 %v913
    %943 = vmatprep.subr.mxu0 0.0
    %944 = vmatpush1.msra.mxu0 %v912
    %945 = vmatprep.subr.mxu0 0.0
    %946 = vmatpush1.msra.mxu0 %v911
    %947 = vmatprep.subr.mxu0 0.0
    %948 = vmatpush1.msra.mxu0 %v910
    %949 = vmatprep.subr.mxu0 0.0
    %950 = vmatpush1.msra.mxu0 %v909
    %951 = vmatprep.subr.mxu0 0.0
    %952 = vmatpush1.msra.mxu0 %v908
    %953 = vmatprep.subr.mxu0 0.0
    %954 = vmatpush1.msra.mxu0 %v907
    %955 = vmatprep.subr.mxu0 0.0
    %956 = vmatpush2.msra.mxu0 0.0
    %957 = vmatprep.subr.mxu0 0.0
    %958 = vmatpush2.msra.mxu0 0.0
    %959 = vmatprep.subr.mxu0 0.0
    %960 = vmatpush2.msra.mxu0 0.0
    %961 = vmatprep.subr.mxu0 0.0
    %962 = vmatpush2.msra.mxu0 0.0
    %963 = vmatprep.subr.mxu0 0.0
    %964 = vmatpush2.msra.mxu0 0.0
    %965 = vmatprep.subr.mxu0 0.0
    %966 = vmatpush2.msra.mxu0 0.0
    %967 = vmatprep.subr.mxu0 0.0
    %968 = vmatpush2.msra.mxu0 0.0
    %969 = vmatprep.subr.mxu0 0.0
    %970 = vmatpush2.msra.mxu0 0.0
    %971 = vmatprep.subr.mxu0 0.0
    %972 = vmatpush2.msra.mxu0 0.0
    %973 = vmatprep.subr.mxu0 0.0
    %974 = vmatpush2.msra.mxu0 0.0
    %975 = vmatprep.subr.mxu0 0.0
    %976 = vmatpush2.msra.mxu0 0.0
    %977 = vmatprep.subr.mxu0 0.0
    %978 = vmatpush2.msra.mxu0 0.0
    %979 = vmatprep.subr.mxu0 0.0
    %980 = vmatpush2.msra.mxu0 0.0
    %981 = vmatprep.subr.mxu0 0.0
    %982 = vmatpush2.msra.mxu0 0.0
    %983 = vmatprep.subr.mxu0 0.0
    %984 = vmatpush2.msra.mxu0 0.0
    %985 = vmatprep.subr.mxu0 0.0
    %986 = vmatpush2.msra.mxu0 0.0
    %987 = vmatprep.mubr.f32.mxu0 0.0
    %988 = vmatmul.mubr.f32.gmra.mxu0 %v906
    %v989 = vpop.f32.mrf.mxu0
    %v990 = vadd.f32 0.0, %v989
    %v991 = vpop.f32.mrf.mxu0
    %992 = vdwg.mxu0
    %993 = vst [vmem:[#allocation2] sm:$0xff] %v990
    %v994 = vld [vmem:[#allocation2] sm:$0xff]
    %s995 = scalar_lea.vmem [#allocation8], 80
    %996 = vst [vmem:[%s995] sm:$0xff] %v994
    %v997 = vtanh.pop %v994
    %v998 = vld [vmem:[#allocation6] sm:$0xff]
    %v999 = vld [vmem:[#allocation6 + $0x8] sm:$0xff]
    %v1000 = vld [vmem:[#allocation6 + $0x10] sm:$0xff]
    %v1001 = vld [vmem:[#allocation6 + $0x18] sm:$0xff]
    %v1002 = vld [vmem:[#allocation6 + $0x20] sm:$0xff]
    %v1003 = vld [vmem:[#allocation6 + $0x28] sm:$0xff]
    %v1004 = vld [vmem:[#allocation6 + $0x30] sm:$0xff]
    %v1005 = vld [vmem:[#allocation6 + $0x38] sm:$0xff]
    %v1006 = vld [vmem:[#allocation6 + $0x40] sm:$0xff]
    %v1007 = vld [vmem:[#allocation6 + $0x48] sm:$0xff]
    %v1008 = vld [vmem:[#allocation6 + $0x50] sm:$0xff]
    %v1009 = vld [vmem:[#allocation6 + $0x58] sm:$0xff]
    %v1010 = vld [vmem:[#allocation6 + $0x60] sm:$0xff]
    %v1011 = vld [vmem:[#allocation6 + $0x68] sm:$0xff]
    %v1012 = vld [vmem:[#allocation6 + $0x70] sm:$0xff]
    %v1013 = vld [vmem:[#allocation6 + $0x78] sm:$0xff]
    %1014 = vmatprep.subr.mxu0 0.0
    %1015 = vmatpush1.msra.mxu0 %v1013
    %1016 = vmatprep.subr.mxu0 0.0
    %1017 = vmatpush1.msra.mxu0 %v1012
    %1018 = vmatprep.subr.mxu0 0.0
    %1019 = vmatpush1.msra.mxu0 %v1011
    %1020 = vmatprep.subr.mxu0 0.0
    %1021 = vmatpush1.msra.mxu0 %v1010
    %1022 = vmatprep.subr.mxu0 0.0
    %1023 = vmatpush1.msra.mxu0 %v1009
    %1024 = vmatprep.subr.mxu0 0.0
    %1025 = vmatpush1.msra.mxu0 %v1008
    %1026 = vmatprep.subr.mxu0 0.0
    %1027 = vmatpush1.msra.mxu0 %v1007
    %1028 = vmatprep.subr.mxu0 0.0
    %1029 = vmatpush1.msra.mxu0 %v1006
    %1030 = vmatprep.subr.mxu0 0.0
    %1031 = vmatpush1.msra.mxu0 %v1005
    %1032 = vmatprep.subr.mxu0 0.0
    %1033 = vmatpush1.msra.mxu0 %v1004
    %1034 = vmatprep.subr.mxu0 0.0
    %1035 = vmatpush1.msra.mxu0 %v1003
    %1036 = vmatprep.subr.mxu0 0.0
    %1037 = vmatpush1.msra.mxu0 %v1002
    %1038 = vmatprep.subr.mxu0 0.0
    %1039 = vmatpush1.msra.mxu0 %v1001
    %1040 = vmatprep.subr.mxu0 0.0
    %1041 = vmatpush1.msra.mxu0 %v1000
    %1042 = vmatprep.subr.mxu0 0.0
    %1043 = vmatpush1.msra.mxu0 %v999
    %1044 = vmatprep.subr.mxu0 0.0
    %1045 = vmatpush1.msra.mxu0 %v998
    %1046 = vmatprep.subr.mxu0 0.0
    %1047 = vmatpush2.msra.mxu0 0.0
    %1048 = vmatprep.subr.mxu0 0.0
    %1049 = vmatpush2.msra.mxu0 0.0
    %1050 = vmatprep.subr.mxu0 0.0
    %1051 = vmatpush2.msra.mxu0 0.0
    %1052 = vmatprep.subr.mxu0 0.0
    %1053 = vmatpush2.msra.mxu0 0.0
    %1054 = vmatprep.subr.mxu0 0.0
    %1055 = vmatpush2.msra.mxu0 0.0
    %1056 = vmatprep.subr.mxu0 0.0
    %1057 = vmatpush2.msra.mxu0 0.0
    %1058 = vmatprep.subr.mxu0 0.0
    %1059 = vmatpush2.msra.mxu0 0.0
    %1060 = vmatprep.subr.mxu0 0.0
    %1061 = vmatpush2.msra.mxu0 0.0
    %1062 = vmatprep.subr.mxu0 0.0
    %1063 = vmatpush2.msra.mxu0 0.0
    %1064 = vmatprep.subr.mxu0 0.0
    %1065 = vmatpush2.msra.mxu0 0.0
    %1066 = vmatprep.subr.mxu0 0.0
    %1067 = vmatpush2.msra.mxu0 0.0
    %1068 = vmatprep.subr.mxu0 0.0
    %1069 = vmatpush2.msra.mxu0 0.0
    %1070 = vmatprep.subr.mxu0 0.0
    %1071 = vmatpush2.msra.mxu0 0.0
    %1072 = vmatprep.subr.mxu0 0.0
    %1073 = vmatpush2.msra.mxu0 0.0
    %1074 = vmatprep.subr.mxu0 0.0
    %1075 = vmatpush2.msra.mxu0 0.0
    %1076 = vmatprep.subr.mxu0 0.0
    %1077 = vmatpush2.msra.mxu0 0.0
    %1078 = vmatprep.mubr.f32.mxu0 0.0
    %1079 = vmatmul.mubr.f32.gmra.mxu0 %v997
    %v1080 = vpop.f32.mrf.mxu0
    %v1081 = vadd.f32 0.0, %v1080
    %v1082 = vpop.f32.mrf.mxu0
    %1083 = vdwg.mxu0
    %1084 = vst [vmem:[#allocation2] sm:$0xff] %v1081
    %v1085 = vld [vmem:[#allocation2] sm:$0xff]
    %s1086 = scalar_lea.vmem [#allocation8], 88
    %1087 = vst [vmem:[%s1086] sm:$0xff] %v1085
    %v1088 = vtanh.pop %v1085
    %v1089 = vld [vmem:[#allocation6] sm:$0xff]
    %v1090 = vld [vmem:[#allocation6 + $0x8] sm:$0xff]
    %v1091 = vld [vmem:[#allocation6 + $0x10] sm:$0xff]
    %v1092 = vld [vmem:[#allocation6 + $0x18] sm:$0xff]
    %v1093 = vld [vmem:[#allocation6 + $0x20] sm:$0xff]
    %v1094 = vld [vmem:[#allocation6 + $0x28] sm:$0xff]
    %v1095 = vld [vmem:[#allocation6 + $0x30] sm:$0xff]
    %v1096 = vld [vmem:[#allocation6 + $0x38] sm:$0xff]
    %v1097 = vld [vmem:[#allocation6 + $0x40] sm:$0xff]
    %v1098 = vld [vmem:[#allocation6 + $0x48] sm:$0xff]
    %v1099 = vld [vmem:[#allocation6 + $0x50] sm:$0xff]
    %v1100 = vld [vmem:[#allocation6 + $0x58] sm:$0xff]
    %v1101 = vld [vmem:[#allocation6 + $0x60] sm:$0xff]
    %v1102 = vld [vmem:[#allocation6 + $0x68] sm:$0xff]
    %v1103 = vld [vmem:[#allocation6 + $0x70] sm:$0xff]
    %v1104 = vld [vmem:[#allocation6 + $0x78] sm:$0xff]
    %1105 = vmatprep.subr.mxu0 0.0
    %1106 = vmatpush1.msra.mxu0 %v1104
    %1107 = vmatprep.subr.mxu0 0.0
    %1108 = vmatpush1.msra.mxu0 %v1103
    %1109 = vmatprep.subr.mxu0 0.0
    %1110 = vmatpush1.msra.mxu0 %v1102
    %1111 = vmatprep.subr.mxu0 0.0
    %1112 = vmatpush1.msra.mxu0 %v1101
    %1113 = vmatprep.subr.mxu0 0.0
    %1114 = vmatpush1.msra.mxu0 %v1100
    %1115 = vmatprep.subr.mxu0 0.0
    %1116 = vmatpush1.msra.mxu0 %v1099
    %1117 = vmatprep.subr.mxu0 0.0
    %1118 = vmatpush1.msra.mxu0 %v1098
    %1119 = vmatprep.subr.mxu0 0.0
    %1120 = vmatpush1.msra.mxu0 %v1097
    %1121 = vmatprep.subr.mxu0 0.0
    %1122 = vmatpush1.msra.mxu0 %v1096
    %1123 = vmatprep.subr.mxu0 0.0
    %1124 = vmatpush1.msra.mxu0 %v1095
    %1125 = vmatprep.subr.mxu0 0.0
    %1126 = vmatpush1.msra.mxu0 %v1094
    %1127 = vmatprep.subr.mxu0 0.0
    %1128 = vmatpush1.msra.mxu0 %v1093
    %1129 = vmatprep.subr.mxu0 0.0
    %1130 = vmatpush1.msra.mxu0 %v1092
    %1131 = vmatprep.subr.mxu0 0.0
    %1132 = vmatpush1.msra.mxu0 %v1091
    %1133 = vmatprep.subr.mxu0 0.0
    %1134 = vmatpush1.msra.mxu0 %v1090
    %1135 = vmatprep.subr.mxu0 0.0
    %1136 = vmatpush1.msra.mxu0 %v1089
    %1137 = vmatprep.subr.mxu0 0.0
    %1138 = vmatpush2.msra.mxu0 0.0
    %1139 = vmatprep.subr.mxu0 0.0
    %1140 = vmatpush2.msra.mxu0 0.0
    %1141 = vmatprep.subr.mxu0 0.0
    %1142 = vmatpush2.msra.mxu0 0.0
    %1143 = vmatprep.subr.mxu0 0.0
    %1144 = vmatpush2.msra.mxu0 0.0
    %1145 = vmatprep.subr.mxu0 0.0
    %1146 = vmatpush2.msra.mxu0 0.0
    %1147 = vmatprep.subr.mxu0 0.0
    %1148 = vmatpush2.msra.mxu0 0.0
    %1149 = vmatprep.subr.mxu0 0.0
    %1150 = vmatpush2.msra.mxu0 0.0
    %1151 = vmatprep.subr.mxu0 0.0
    %1152 = vmatpush2.msra.mxu0 0.0
    %1153 = vmatprep.subr.mxu0 0.0
    %1154 = vmatpush2.msra.mxu0 0.0
    %1155 = vmatprep.subr.mxu0 0.0
    %1156 = vmatpush2.msra.mxu0 0.0
    %1157 = vmatprep.subr.mxu0 0.0
    %1158 = vmatpush2.msra.mxu0 0.0
    %1159 = vmatprep.subr.mxu0 0.0
    %1160 = vmatpush2.msra.mxu0 0.0
    %1161 = vmatprep.subr.mxu0 0.0
    %1162 = vmatpush2.msra.mxu0 0.0
    %1163 = vmatprep.subr.mxu0 0.0
    %1164 = vmatpush2.msra.mxu0 0.0
    %1165 = vmatprep.subr.mxu0 0.0
    %1166 = vmatpush2.msra.mxu0 0.0
    %1167 = vmatprep.subr.mxu0 0.0
    %1168 = vmatpush2.msra.mxu0 0.0
    %1169 = vmatprep.mubr.f32.mxu0 0.0
    %1170 = vmatmul.mubr.f32.gmra.mxu0 %v1088
    %v1171 = vpop.f32.mrf.mxu0
    %v1172 = vadd.f32 0.0, %v1171
    %v1173 = vpop.f32.mrf.mxu0
    %1174 = vdwg.mxu0
    %1175 = vst [vmem:[#allocation2] sm:$0xff] %v1172
    // Predicated region
    $region22: #{tpu_custom_call.1} parent=1 // pred_check
      _
    $region23: #{tpu_custom_call.1} parent=1 // pred_check_branch
      %1177 = sbr.rel (0) target = $region25
    $region24: #{tpu_custom_call.1} parent=1 // pred_region
      %s1179 = ssub.s32 1536, 1536
      %1180 = vsyncadd [#allocation5], %s1179
      %s1181 = sshll.u32 [#allocation8], 4
      %s1182 = int_to_ptr.vmem [resolvable:$true] %s1181
      %1187 = dma.vmem_to_hbm [thread:$0]  %s1182, 1536, %s3, [#allocation5], 128, 128, 8
    $region25: #{tpu_custom_call.1} parent=1 // pred_fallthru
      _
    // Predicated region
    $region26: #{tpu_custom_call.1} parent=1 // pred_check
      _
    $region27: #{tpu_custom_call.1} parent=1 // pred_check_branch
      %1189 = sbr.rel (0) target = $region29
    $region28: #{tpu_custom_call.1} parent=1 // pred_region
      %1190 = dma.done [#allocation5], 1536
    $region29: #{tpu_custom_call.1} parent=1 // pred_fallthru
      _
    %1191 = vsyncpa [#allocation4], 1
    %1192 = vsyncpa [#allocation7], 1
    %1193 = vsyncpa [#allocation5], 1

</llo_original>
